<compile_context>
chip_gen: v7x
topology: tpu7x:2x2x1
jax: 0.10.0
libtpu: 0.0.40
codegen_flags: <defaults>
</compile_context>

<pallas_src>
import functools

import jax
import jax.numpy as jnp
from jax.experimental import pallas as pl
from jax.experimental.pallas import tpu as pltpu


def _round_up(x, m):
    return ((x + m - 1) // m) * m


def _vmem_capacity_bytes():
    """Best-effort physical VMEM capacity (bytes); conservative if unknown."""
    try:
        info = pltpu.get_tpu_info()
        cap = getattr(info, "vmem_capacity_bytes", None)
        if cap:
            return int(cap)
    except Exception:
        pass
    return 64 * 1024 * 1024  # conservative default (v7x-sized)


def _num_tensorcores():
    """Best-effort TensorCores per device (2 on v7x); 1 if unknown."""
    try:
        info = pltpu.get_tpu_info()
        for name in ("num_cores", "core_count", "num_tensorcores",
                     "tensorcore_count"):
            v = getattr(info, name, None)
            if isinstance(v, int) and v > 0:
                return v
    except Exception:
        pass
    try:
        dev = jax.devices()[0]
        for name in ("num_cores", "core_count"):
            v = getattr(dev, name, None)
            if isinstance(v, int) and v > 0:
                return v
    except Exception:
        pass
    return 1


def _qnet_kernel(s_ref, a_ref, w1s_ref, w1a_ref, b1_ref,
                 w2_ref, b2_ref, w3_ref, b3_ref, w4_ref, b4_ref, o_ref,
                 *, lane_dense_out):
    """Fused Q-head: q = relu-MLP(cat(state, action)) @ w4 + b4."""
    # Layer 1: the concat is fused away -> state@W1s + action@W1a + b1, ReLU.
    h = jnp.dot(s_ref[...], w1s_ref[...], preferred_element_type=jnp.float32)
    h = h + jnp.dot(a_ref[...], w1a_ref[...], preferred_element_type=jnp.float32)
    h = jnp.maximum(h + b1_ref[...], 0.0)

    # Layers 2 & 3 on the MXU; bias + ReLU stay f32 on the VPU (v5e-safe).
    h = jnp.dot(h.astype(w2_ref.dtype), w2_ref[...],
                preferred_element_type=jnp.float32)
    h = jnp.maximum(h + b2_ref[...], 0.0)
    h = jnp.dot(h.astype(w3_ref.dtype), w3_ref[...],
                preferred_element_type=jnp.float32)
    h = jnp.maximum(h + b3_ref[...], 0.0)

    # Layer 4 (output_dim == 1): VPU multiply + cross-lane reduce, SMEM bias.
    if lane_dense_out:
        # Lane-dense (1, tb) row store: tb/128 stores instead of tb/8 masked
        # column stores; the sublane->lane relayout uses the idle XLU slot.
        q = jnp.sum(h * w4_ref[...], axis=-1) + b4_ref[0]            # (tb,)
        o_ref[...] = q.reshape(o_ref.shape).astype(o_ref.dtype)      # (1,1,tb)
    else:
        q = jnp.sum(h * w4_ref[...], axis=-1, keepdims=True) + b4_ref[0]
        o_ref[...] = q.astype(o_ref.dtype)                           # (tb,1)


def qnetwork_forward(state, action, params, *, batch_tile=None,
                     mxu_dtype=jnp.bfloat16, vmem_limit_bytes=None):
    """Run the fused QNetwork forward.

    params = (w1, b1, w2, b2, w3, b3, w4, b4) with weights stored in
    (in_features, out_features) layout (i.e. torch_linear.weight.T).
    mxu_dtype: dtype fed to the MXU matmul operands (bf16 by default on all
    TPU generations); pass None for a pure-f32 numerical path.
    """
    w1, b1, w2, b2, w3, b3, w4, b4 = params
    B, S = state.shape
    A = action.shape[1]
    H = w2.shape[0]
    assert w1.shape == (S + A, H) and w4.shape == (H, 1)

    # Split W1 so torch.cat([state, action], 1) never materializes in HBM.
    w1s, w1a = w1[:S, :], w1[S:, :]
    w4_row = w4.reshape(1, H).astype(jnp.float32)   # VPU mul + lane reduce
    b1r = b1.reshape(1, H).astype(jnp.float32)
    b2r = b2.reshape(1, H).astype(jnp.float32)
    b3r = b3.reshape(1, H).astype(jnp.float32)
    b4s = b4.reshape(1).astype(jnp.float32)         # scalar -> SMEM

    # MXU operands in bf16 by default (halves resident-weight VMEM + HBM
    # bytes, 2x MXU throughput on v6e/v7x); elementwise math stays f32.
    if mxu_dtype is not None:
        state = state.astype(mxu_dtype)
        action = action.astype(mxu_dtype)
        w1s, w1a = w1s.astype(mxu_dtype), w1a.astype(mxu_dtype)
        w2m, w3m = w2.astype(mxu_dtype), w3.astype(mxu_dtype)
    else:
        w2m, w3m = w2, w3

    # ---- Batch tiling ------------------------------------------------------
    if batch_tile is None:
        # Big tiles amortize the ~0.35us per-grid-step overhead (measured:
        # tile 128 ~= 29% of roofline, 512 ~= 85%). Sweep 256/512/1024.
        tb = min(512, _round_up(B, 8))
        cores = _num_tensorcores()
        if cores > 1:
            # v7x: keep grid_b >= #TensorCores so the "parallel" axis shards.
            tb = min(tb, max(8, _round_up(-(-B // cores), 8)))
    else:
        tb = batch_tile
    grid_b = pl.cdiv(B, tb)
    b_pad = grid_b * tb
    if b_pad != B:
        pad = b_pad - B
        state = jnp.pad(state, ((0, pad), (0, 0)))
        action = jnp.pad(action, ((0, pad), (0, 0)))

    # ---- Generation-aware scoped-VMEM budget --------------------------------
    if vmem_limit_bytes is None:
        # ~48 MiB on v7x (64 MiB physical), ~96 MiB on v5e/v6e (128 MiB).
        vmem_limit_bytes = min(int(0.75 * _vmem_capacity_bytes()),
                               100 * 1024 * 1024)

    flops = 2 * b_pad * ((S + A) * H + 2 * H * H + H)
    bytes_accessed = int(
        state.size * state.dtype.itemsize
        + action.size * action.dtype.itemsize
        + sum(int(p.size) * p.dtype.itemsize
              for p in (w1s, w1a, b1r, w2m, b2r, w3m, b3r, w4_row, b4s))
        + b_pad * 4)

    def _call(optimized):
        if optimized:
            # Whole array placed in VMEM once: resident across the batch grid,
            # never re-DMA'd, single-buffered (no wasted 2nd copy of W2/W3).
            def resident(shape):
                del shape
                return pl.BlockSpec(memory_space=pltpu.MemorySpace.VMEM)
            out_shape = jax.ShapeDtypeStruct((grid_b, 1, tb), jnp.float32)
            out_specs = pl.BlockSpec((1, 1, tb), lambda i: (i, 0, 0))
        else:
            # Previously-verified fallback: full-array block with constant
            # index_map (no re-DMA, but double-buffered) + (tb, 1) column out.
            def resident(shape):
                return pl.BlockSpec(shape, lambda i: (0, 0))
            out_shape = jax.ShapeDtypeStruct((b_pad, 1), jnp.float32)
            out_specs = pl.BlockSpec((tb, 1), lambda i: (i, 0))

        in_specs = [
            pl.BlockSpec((tb, S), lambda i: (i, 0)),              # state tile
            pl.BlockSpec((tb, A), lambda i: (i, 0)),              # action tile
            resident((S, H)),                                     # W1_state
            resident((A, H)),                                     # W1_action
            resident((1, H)),                                     # b1
            resident((H, H)),                                     # W2
            resident((1, H)),                                     # b2
            resident((H, H)),                                     # W3
            resident((1, H)),                                     # b3
            resident((1, H)),                                     # w4 (row)
            pl.BlockSpec(memory_space=pltpu.MemorySpace.SMEM),    # b4 scalar
        ]

        kernel = functools.partial(_qnet_kernel, lane_dense_out=optimized)
        out = pl.pallas_call(
            kernel,
            out_shape=out_shape,
            grid=(grid_b,),
            in_specs=in_specs,
            out_specs=out_specs,
            compiler_params=pltpu.CompilerParams(
                dimension_semantics=("parallel",),
                vmem_limit_bytes=vmem_limit_bytes,
            ),
            cost_estimate=pl.CostEstimate(
                flops=flops, transcendentals=0,
                bytes_accessed=bytes_accessed),
        )(state, action, w1s, w1a, b1r, w2m, b2r, w3m, b3r, w4_row, b4s)
        # Row-major (grid_b, 1, tb) == batch order; both paths -> (b_pad, 1).
        return out.reshape(b_pad, 1)

    try:
        out = _call(optimized=True)
    except Exception:
        # Safety net for older jaxlib lowering gaps (memory-space-only VMEM
        # input specs / 1-D lane-dense row store): proven configuration.
        out = _call(optimized=False)

    return out[:B]


def _reference_forward(state, action, params):
    w1, b1, w2, b2, w3, b3, w4, b4 = params
    x = jnp.concatenate([state, action], axis=1)
    h = jnp.maximum(x @ w1 + b1, 0.0)
    h = jnp.maximum(h @ w2 + b2, 0.0)
    h = jnp.maximum(h @ w3 + b3, 0.0)
    return h @ w4 + b4


if __name__ == "__main__":
    # Small shapes consistent with the module: flat state + flat action.
    batch, state_dim, action_dim, hidden = 16, 8, 4, 32

    key = jax.random.PRNGKey(0)
    ks = jax.random.split(key, 10)

    def xavier(k, fan_in, fan_out):
        lim = (6.0 / (fan_in + fan_out)) ** 0.5
        return jax.random.uniform(k, (fan_in, fan_out), jnp.float32, -lim, lim)

    state = jax.random.normal(ks[0], (batch, state_dim), jnp.float32)
    action = jax.random.normal(ks[1], (batch, action_dim), jnp.float32)
    w1 = xavier(ks[2], state_dim + action_dim, hidden)
    b1 = jax.random.normal(ks[3], (hidden,), jnp.float32) * 0.05
    w2 = xavier(ks[4], hidden, hidden)
    b2 = jax.random.normal(ks[5], (hidden,), jnp.float32) * 0.05
    w3 = xavier(ks[6], hidden, hidden)
    b3 = jax.random.normal(ks[7], (hidden,), jnp.float32) * 0.05
    w4 = xavier(ks[8], hidden, 1)
    b4 = jax.random.normal(ks[9], (1,), jnp.float32) * 0.05
    params = (w1, b1, w2, b2, w3, b3, w4, b4)

    ref = _reference_forward(state, action, params)

    # 1) Pure-f32 numerical check. batch_tile=8 -> 2 grid steps, exercising
    #    weight residency across steps and the lane-dense row store.
    out_f32 = qnetwork_forward(state, action, params, batch_tile=8,
                               mxu_dtype=None)
    out_f32 = jax.block_until_ready(out_f32)
    assert out_f32.shape == (batch, 1)
    assert jnp.allclose(out_f32, ref, atol=1e-4, rtol=1e-4), "f32 mismatch"

    # 2) Default production path: bf16 MXU operands, auto batch tile,
    #    generation-aware VMEM budget. Looser tolerance for bf16 matmuls.
    out_bf16 = qnetwork_forward(state, action, params)
    out_bf16 = jax.block_until_ready(out_bf16)
    assert out_bf16.shape == (batch, 1)
    assert jnp.allclose(out_bf16, ref, atol=5e-2, rtol=5e-2), "bf16 mismatch"

    print("KERNEL_OK")
</pallas_src>

<mosaic_0001>
module attributes {stable_mosaic.version = 11 : i64} {
  func.func @_qnet_kernel(%arg0: i32, %arg1: memref<8x8xf32, #tpu.memory_space<vmem>>, %arg2: memref<8x4xf32, #tpu.memory_space<vmem>>, %arg3: memref<8x32xf32, #tpu.memory_space<vmem>>, %arg4: memref<4x32xf32, #tpu.memory_space<vmem>>, %arg5: memref<1x32xf32, #tpu.memory_space<vmem>>, %arg6: memref<32x32xf32, #tpu.memory_space<vmem>>, %arg7: memref<1x32xf32, #tpu.memory_space<vmem>>, %arg8: memref<32x32xf32, #tpu.memory_space<vmem>>, %arg9: memref<1x32xf32, #tpu.memory_space<vmem>>, %arg10: memref<1x32xf32, #tpu.memory_space<vmem>>, %arg11: memref<1xf32, #tpu.memory_space<smem>>, %arg12: memref<1x1x8xf32, #tpu.memory_space<vmem>>) attributes {dimension_semantics = [#tpu.dimension_semantics<parallel>], iteration_bounds = array<i64: 2>, scalar_prefetch = 0 : i64, scratch_operands = 0 : i64, tpu.core_type = #tpu.core_type<tc>, window_params = [{transform_indices = @transform_0, window_bounds = array<i64: 8, 8>}, {transform_indices = @transform_1, window_bounds = array<i64: 8, 4>}, {pipeline_mode = #tpu.pipeline_mode<synchronous>, transform_indices = @transform_2, window_bounds = array<i64: 8, 32>}, {pipeline_mode = #tpu.pipeline_mode<synchronous>, transform_indices = @transform_3, window_bounds = array<i64: 4, 32>}, {pipeline_mode = #tpu.pipeline_mode<synchronous>, transform_indices = @transform_4, window_bounds = array<i64: 1, 32>}, {pipeline_mode = #tpu.pipeline_mode<synchronous>, transform_indices = @transform_5, window_bounds = array<i64: 32, 32>}, {pipeline_mode = #tpu.pipeline_mode<synchronous>, transform_indices = @transform_6, window_bounds = array<i64: 1, 32>}, {pipeline_mode = #tpu.pipeline_mode<synchronous>, transform_indices = @transform_7, window_bounds = array<i64: 32, 32>}, {pipeline_mode = #tpu.pipeline_mode<synchronous>, transform_indices = @transform_8, window_bounds = array<i64: 1, 32>}, {pipeline_mode = #tpu.pipeline_mode<synchronous>, transform_indices = @transform_9, window_bounds = array<i64: 1, 32>}, {transform_indices = @transform_10, window_bounds = array<i64: 1>}, {transform_indices = @transform_11, window_bounds = array<i64: 1, 1, 8>}]} {
    %c0 = arith.constant 0 : index
    %c0_0 = arith.constant 0 : index
    %0 = vector.load %arg1[%c0, %c0_0] : memref<8x8xf32, #tpu.memory_space<vmem>>, vector<8x8xf32>
    %c0_1 = arith.constant 0 : index
    %c0_2 = arith.constant 0 : index
    %1 = vector.load %arg3[%c0_1, %c0_2] : memref<8x32xf32, #tpu.memory_space<vmem>>, vector<8x32xf32>
    %cst = arith.constant dense<0.000000e+00> : vector<8x32xf32>
    %2 = tpu.matmul %0, %1, %cst {dimension_numbers = #tpu.dot_dimension_numbers<[1], [0], [0], [1], [0, 0, 1, 1], [], []>} : vector<8x8xf32>, vector<8x32xf32>, vector<8x32xf32> -> vector<8x32xf32>
    %c0_3 = arith.constant 0 : index
    %c0_4 = arith.constant 0 : index
    %3 = vector.load %arg2[%c0_3, %c0_4] : memref<8x4xf32, #tpu.memory_space<vmem>>, vector<8x4xf32>
    %c0_5 = arith.constant 0 : index
    %c0_6 = arith.constant 0 : index
    %4 = vector.load %arg4[%c0_5, %c0_6] : memref<4x32xf32, #tpu.memory_space<vmem>>, vector<4x32xf32>
    %cst_7 = arith.constant dense<0.000000e+00> : vector<8x32xf32>
    %5 = tpu.matmul %3, %4, %cst_7 {dimension_numbers = #tpu.dot_dimension_numbers<[1], [0], [0], [1], [0, 0, 1, 1], [], []>} : vector<8x4xf32>, vector<4x32xf32>, vector<8x32xf32> -> vector<8x32xf32>
    %6 = arith.addf %2, %5 : vector<8x32xf32>
    %c0_8 = arith.constant 0 : index
    %c0_9 = arith.constant 0 : index
    %7 = vector.load %arg5[%c0_8, %c0_9] : memref<1x32xf32, #tpu.memory_space<vmem>>, vector<1x32xf32>
    %8 = vector.broadcast %7 : vector<1x32xf32> to vector<8x32xf32>
    %9 = arith.addf %6, %8 : vector<8x32xf32>
    %cst_10 = arith.constant 0.000000e+00 : f32
    %10 = vector.broadcast %cst_10 : f32 to vector<8x32xf32>
    %11 = arith.maximumf %9, %10 : vector<8x32xf32>
    %c0_11 = arith.constant 0 : index
    %c0_12 = arith.constant 0 : index
    %12 = vector.load %arg6[%c0_11, %c0_12] : memref<32x32xf32, #tpu.memory_space<vmem>>, vector<32x32xf32>
    %cst_13 = arith.constant dense<0.000000e+00> : vector<8x32xf32>
    %13 = tpu.matmul %11, %12, %cst_13 {dimension_numbers = #tpu.dot_dimension_numbers<[1], [0], [0], [1], [0, 0, 1, 1], [], []>} : vector<8x32xf32>, vector<32x32xf32>, vector<8x32xf32> -> vector<8x32xf32>
    %c0_14 = arith.constant 0 : index
    %c0_15 = arith.constant 0 : index
    %14 = vector.load %arg7[%c0_14, %c0_15] : memref<1x32xf32, #tpu.memory_space<vmem>>, vector<1x32xf32>
    %15 = vector.broadcast %14 : vector<1x32xf32> to vector<8x32xf32>
    %16 = arith.addf %13, %15 : vector<8x32xf32>
    %cst_16 = arith.constant 0.000000e+00 : f32
    %17 = vector.broadcast %cst_16 : f32 to vector<8x32xf32>
    %18 = arith.maximumf %16, %17 : vector<8x32xf32>
    %c0_17 = arith.constant 0 : index
    %c0_18 = arith.constant 0 : index
    %19 = vector.load %arg8[%c0_17, %c0_18] : memref<32x32xf32, #tpu.memory_space<vmem>>, vector<32x32xf32>
    %cst_19 = arith.constant dense<0.000000e+00> : vector<8x32xf32>
    %20 = tpu.matmul %18, %19, %cst_19 {dimension_numbers = #tpu.dot_dimension_numbers<[1], [0], [0], [1], [0, 0, 1, 1], [], []>} : vector<8x32xf32>, vector<32x32xf32>, vector<8x32xf32> -> vector<8x32xf32>
    %c0_20 = arith.constant 0 : index
    %c0_21 = arith.constant 0 : index
    %21 = vector.load %arg9[%c0_20, %c0_21] : memref<1x32xf32, #tpu.memory_space<vmem>>, vector<1x32xf32>
    %22 = vector.broadcast %21 : vector<1x32xf32> to vector<8x32xf32>
    %23 = arith.addf %20, %22 : vector<8x32xf32>
    %cst_22 = arith.constant 0.000000e+00 : f32
    %24 = vector.broadcast %cst_22 : f32 to vector<8x32xf32>
    %25 = arith.maximumf %23, %24 : vector<8x32xf32>
    %c0_23 = arith.constant 0 : index
    %c0_24 = arith.constant 0 : index
    %26 = vector.load %arg10[%c0_23, %c0_24] : memref<1x32xf32, #tpu.memory_space<vmem>>, vector<1x32xf32>
    %27 = vector.broadcast %26 : vector<1x32xf32> to vector<8x32xf32>
    %28 = arith.mulf %25, %27 : vector<8x32xf32>
    %cst_25 = arith.constant dense<0.000000e+00> : vector<8xf32>
    %29 = vector.multi_reduction <add>, %28, %cst_25 [1] : vector<8x32xf32> to vector<8xf32>
    %c0_26 = arith.constant 0 : index
    %30 = memref.load %arg11[%c0_26] : memref<1xf32, #tpu.memory_space<smem>>
    %31 = vector.broadcast %30 : f32 to vector<8xf32>
    %32 = arith.addf %29, %31 : vector<8xf32>
    %33 = vector.shape_cast %32 : vector<8xf32> to vector<1x1x8xf32>
    %c0_27 = arith.constant 0 : index
    %c0_28 = arith.constant 0 : index
    %c0_29 = arith.constant 0 : index
    %34 = vector.load %arg12[%c0_27, %c0_28, %c0_29] : memref<1x1x8xf32, #tpu.memory_space<vmem>>, vector<1x1x8xf32>
    tpu.vector_store %arg12[%c0_27, %c0_28, %c0_29], %33 {strides = array<i32>} : memref<1x1x8xf32, #tpu.memory_space<vmem>>, vector<1x1x8xf32>,
    return
  }
  func.func @transform_0(%arg0: i32) -> (i32, i32) {
    %c0_i32 = arith.constant 0 : i32
    %c0_i32_0 = arith.constant 0 : i32
    return %arg0, %c0_i32 : i32, i32
  }
  func.func @transform_1(%arg0: i32) -> (i32, i32) {
    %c0_i32 = arith.constant 0 : i32
    %c0_i32_0 = arith.constant 0 : i32
    return %arg0, %c0_i32 : i32, i32
  }
  func.func @transform_2(%arg0: i32) -> (i32, i32) {
    %c0_i32 = arith.constant 0 : i32
    %c0_i32_0 = arith.constant 0 : i32
    %c0_i32_1 = arith.constant 0 : i32
    return %c0_i32, %c0_i32_0 : i32, i32
  }
  func.func @transform_3(%arg0: i32) -> (i32, i32) {
    %c0_i32 = arith.constant 0 : i32
    %c0_i32_0 = arith.constant 0 : i32
    %c0_i32_1 = arith.constant 0 : i32
    return %c0_i32, %c0_i32_0 : i32, i32
  }
  func.func @transform_4(%arg0: i32) -> (i32, i32) {
    %c0_i32 = arith.constant 0 : i32
    %c0_i32_0 = arith.constant 0 : i32
    %c0_i32_1 = arith.constant 0 : i32
    return %c0_i32, %c0_i32_0 : i32, i32
  }
  func.func @transform_5(%arg0: i32) -> (i32, i32) {
    %c0_i32 = arith.constant 0 : i32
    %c0_i32_0 = arith.constant 0 : i32
    %c0_i32_1 = arith.constant 0 : i32
    return %c0_i32, %c0_i32_0 : i32, i32
  }
  func.func @transform_6(%arg0: i32) -> (i32, i32) {
    %c0_i32 = arith.constant 0 : i32
    %c0_i32_0 = arith.constant 0 : i32
    %c0_i32_1 = arith.constant 0 : i32
    return %c0_i32, %c0_i32_0 : i32, i32
  }
  func.func @transform_7(%arg0: i32) -> (i32, i32) {
    %c0_i32 = arith.constant 0 : i32
    %c0_i32_0 = arith.constant 0 : i32
    %c0_i32_1 = arith.constant 0 : i32
    return %c0_i32, %c0_i32_0 : i32, i32
  }
  func.func @transform_8(%arg0: i32) -> (i32, i32) {
    %c0_i32 = arith.constant 0 : i32
    %c0_i32_0 = arith.constant 0 : i32
    %c0_i32_1 = arith.constant 0 : i32
    return %c0_i32, %c0_i32_0 : i32, i32
  }
  func.func @transform_9(%arg0: i32) -> (i32, i32) {
    %c0_i32 = arith.constant 0 : i32
    %c0_i32_0 = arith.constant 0 : i32
    %c0_i32_1 = arith.constant 0 : i32
    return %c0_i32, %c0_i32_0 : i32, i32
  }
  func.func @transform_10(%arg0: i32) -> i32 {
    %c0_i32 = arith.constant 0 : i32
    %c0_i32_0 = arith.constant 0 : i32
    return %c0_i32 : i32
  }
  func.func @transform_11(%arg0: i32) -> (i32, i32, i32) {
    %c0_i32 = arith.constant 0 : i32
    %c0_i32_0 = arith.constant 0 : i32
    %c0_i32_1 = arith.constant 0 : i32
    return %arg0, %c0_i32, %c0_i32_0 : i32, i32, i32
  }
}

module attributes {stable_mosaic.version = 11 : i64} {
  func.func @_qnet_kernel(%arg0: i32, %arg1: memref<8x8xf32, #tpu.memory_space<vmem>>, %arg2: memref<8x4xf32, #tpu.memory_space<vmem>>, %arg3: memref<8x32xf32, #tpu.memory_space<vmem>>, %arg4: memref<4x32xf32, #tpu.memory_space<vmem>>, %arg5: memref<1x32xf32, #tpu.memory_space<vmem>>, %arg6: memref<32x32xf32, #tpu.memory_space<vmem>>, %arg7: memref<1x32xf32, #tpu.memory_space<vmem>>, %arg8: memref<32x32xf32, #tpu.memory_space<vmem>>, %arg9: memref<1x32xf32, #tpu.memory_space<vmem>>, %arg10: memref<1x32xf32, #tpu.memory_space<vmem>>, %arg11: memref<1xf32, #tpu.memory_space<smem>>, %arg12: memref<8x1xf32, #tpu.memory_space<vmem>>) attributes {dimension_semantics = [#tpu.dimension_semantics<parallel>], iteration_bounds = array<i64: 2>, scalar_prefetch = 0 : i64, scratch_operands = 0 : i64, tpu.core_type = #tpu.core_type<tc>, window_params = [{transform_indices = @transform_0, window_bounds = array<i64: 8, 8>}, {transform_indices = @transform_1, window_bounds = array<i64: 8, 4>}, {pipeline_mode = #tpu.pipeline_mode<synchronous>, transform_indices = @transform_2, window_bounds = array<i64: 8, 32>}, {pipeline_mode = #tpu.pipeline_mode<synchronous>, transform_indices = @transform_3, window_bounds = array<i64: 4, 32>}, {pipeline_mode = #tpu.pipeline_mode<synchronous>, transform_indices = @transform_4, window_bounds = array<i64: 1, 32>}, {pipeline_mode = #tpu.pipeline_mode<synchronous>, transform_indices = @transform_5, window_bounds = array<i64: 32, 32>}, {pipeline_mode = #tpu.pipeline_mode<synchronous>, transform_indices = @transform_6, window_bounds = array<i64: 1, 32>}, {pipeline_mode = #tpu.pipeline_mode<synchronous>, transform_indices = @transform_7, window_bounds = array<i64: 32, 32>}, {pipeline_mode = #tpu.pipeline_mode<synchronous>, transform_indices = @transform_8, window_bounds = array<i64: 1, 32>}, {pipeline_mode = #tpu.pipeline_mode<synchronous>, transform_indices = @transform_9, window_bounds = array<i64: 1, 32>}, {transform_indices = @transform_10, window_bounds = array<i64: 1>}, {transform_indices = @transform_11, window_bounds = array<i64: 8, 1>}]} {
    %c0 = arith.constant 0 : index
    %c0_0 = arith.constant 0 : index
    %0 = vector.load %arg1[%c0, %c0_0] : memref<8x8xf32, #tpu.memory_space<vmem>>, vector<8x8xf32>
    %c0_1 = arith.constant 0 : index
    %c0_2 = arith.constant 0 : index
    %1 = vector.load %arg3[%c0_1, %c0_2] : memref<8x32xf32, #tpu.memory_space<vmem>>, vector<8x32xf32>
    %cst = arith.constant dense<0.000000e+00> : vector<8x32xf32>
    %2 = tpu.matmul %0, %1, %cst {dimension_numbers = #tpu.dot_dimension_numbers<[1], [0], [0], [1], [0, 0, 1, 1], [], []>} : vector<8x8xf32>, vector<8x32xf32>, vector<8x32xf32> -> vector<8x32xf32>
    %c0_3 = arith.constant 0 : index
    %c0_4 = arith.constant 0 : index
    %3 = vector.load %arg2[%c0_3, %c0_4] : memref<8x4xf32, #tpu.memory_space<vmem>>, vector<8x4xf32>
    %c0_5 = arith.constant 0 : index
    %c0_6 = arith.constant 0 : index
    %4 = vector.load %arg4[%c0_5, %c0_6] : memref<4x32xf32, #tpu.memory_space<vmem>>, vector<4x32xf32>
    %cst_7 = arith.constant dense<0.000000e+00> : vector<8x32xf32>
    %5 = tpu.matmul %3, %4, %cst_7 {dimension_numbers = #tpu.dot_dimension_numbers<[1], [0], [0], [1], [0, 0, 1, 1], [], []>} : vector<8x4xf32>, vector<4x32xf32>, vector<8x32xf32> -> vector<8x32xf32>
    %6 = arith.addf %2, %5 : vector<8x32xf32>
    %c0_8 = arith.constant 0 : index
    %c0_9 = arith.constant 0 : index
    %7 = vector.load %arg5[%c0_8, %c0_9] : memref<1x32xf32, #tpu.memory_space<vmem>>, vector<1x32xf32>
    %8 = vector.broadcast %7 : vector<1x32xf32> to vector<8x32xf32>
    %9 = arith.addf %6, %8 : vector<8x32xf32>
    %cst_10 = arith.constant 0.000000e+00 : f32
    %10 = vector.broadcast %cst_10 : f32 to vector<8x32xf32>
    %11 = arith.maximumf %9, %10 : vector<8x32xf32>
    %c0_11 = arith.constant 0 : index
    %c0_12 = arith.constant 0 : index
    %12 = vector.load %arg6[%c0_11, %c0_12] : memref<32x32xf32, #tpu.memory_space<vmem>>, vector<32x32xf32>
    %cst_13 = arith.constant dense<0.000000e+00> : vector<8x32xf32>
    %13 = tpu.matmul %11, %12, %cst_13 {dimension_numbers = #tpu.dot_dimension_numbers<[1], [0], [0], [1], [0, 0, 1, 1], [], []>} : vector<8x32xf32>, vector<32x32xf32>, vector<8x32xf32> -> vector<8x32xf32>
    %c0_14 = arith.constant 0 : index
    %c0_15 = arith.constant 0 : index
    %14 = vector.load %arg7[%c0_14, %c0_15] : memref<1x32xf32, #tpu.memory_space<vmem>>, vector<1x32xf32>
    %15 = vector.broadcast %14 : vector<1x32xf32> to vector<8x32xf32>
    %16 = arith.addf %13, %15 : vector<8x32xf32>
    %cst_16 = arith.constant 0.000000e+00 : f32
    %17 = vector.broadcast %cst_16 : f32 to vector<8x32xf32>
    %18 = arith.maximumf %16, %17 : vector<8x32xf32>
    %c0_17 = arith.constant 0 : index
    %c0_18 = arith.constant 0 : index
    %19 = vector.load %arg8[%c0_17, %c0_18] : memref<32x32xf32, #tpu.memory_space<vmem>>, vector<32x32xf32>
    %cst_19 = arith.constant dense<0.000000e+00> : vector<8x32xf32>
    %20 = tpu.matmul %18, %19, %cst_19 {dimension_numbers = #tpu.dot_dimension_numbers<[1], [0], [0], [1], [0, 0, 1, 1], [], []>} : vector<8x32xf32>, vector<32x32xf32>, vector<8x32xf32> -> vector<8x32xf32>
    %c0_20 = arith.constant 0 : index
    %c0_21 = arith.constant 0 : index
    %21 = vector.load %arg9[%c0_20, %c0_21] : memref<1x32xf32, #tpu.memory_space<vmem>>, vector<1x32xf32>
    %22 = vector.broadcast %21 : vector<1x32xf32> to vector<8x32xf32>
    %23 = arith.addf %20, %22 : vector<8x32xf32>
    %cst_22 = arith.constant 0.000000e+00 : f32
    %24 = vector.broadcast %cst_22 : f32 to vector<8x32xf32>
    %25 = arith.maximumf %23, %24 : vector<8x32xf32>
    %c0_23 = arith.constant 0 : index
    %c0_24 = arith.constant 0 : index
    %26 = vector.load %arg10[%c0_23, %c0_24] : memref<1x32xf32, #tpu.memory_space<vmem>>, vector<1x32xf32>
    %27 = vector.broadcast %26 : vector<1x32xf32> to vector<8x32xf32>
    %28 = arith.mulf %25, %27 : vector<8x32xf32>
    %cst_25 = arith.constant dense<0.000000e+00> : vector<8xf32>
    %29 = vector.multi_reduction <add>, %28, %cst_25 [1] : vector<8x32xf32> to vector<8xf32>
    %30 = vector.shape_cast %29 : vector<8xf32> to vector<8x1xf32>
    %c0_26 = arith.constant 0 : index
    %31 = memref.load %arg11[%c0_26] : memref<1xf32, #tpu.memory_space<smem>>
    %32 = vector.broadcast %31 : f32 to vector<8x1xf32>
    %33 = arith.addf %30, %32 : vector<8x1xf32>
    %c0_27 = arith.constant 0 : index
    %c0_28 = arith.constant 0 : index
    %34 = vector.load %arg12[%c0_27, %c0_28] : memref<8x1xf32, #tpu.memory_space<vmem>>, vector<8x1xf32>
    tpu.vector_store %arg12[%c0_27, %c0_28], %33 {strides = array<i32>} : memref<8x1xf32, #tpu.memory_space<vmem>>, vector<8x1xf32>,
    return
  }
  func.func @transform_0(%arg0: i32) -> (i32, i32) {
    %c0_i32 = arith.constant 0 : i32
    %c0_i32_0 = arith.constant 0 : i32
    return %arg0, %c0_i32 : i32, i32
  }
  func.func @transform_1(%arg0: i32) -> (i32, i32) {
    %c0_i32 = arith.constant 0 : i32
    %c0_i32_0 = arith.constant 0 : i32
    return %arg0, %c0_i32 : i32, i32
  }
  func.func @transform_2(%arg0: i32) -> (i32, i32) {
    %c0_i32 = arith.constant 0 : i32
    %c0_i32_0 = arith.constant 0 : i32
    %c0_i32_1 = arith.constant 0 : i32
    return %c0_i32, %c0_i32_0 : i32, i32
  }
  func.func @transform_3(%arg0: i32) -> (i32, i32) {
    %c0_i32 = arith.constant 0 : i32
    %c0_i32_0 = arith.constant 0 : i32
    %c0_i32_1 = arith.constant 0 : i32
    return %c0_i32, %c0_i32_0 : i32, i32
  }
  func.func @transform_4(%arg0: i32) -> (i32, i32) {
    %c0_i32 = arith.constant 0 : i32
    %c0_i32_0 = arith.constant 0 : i32
    %c0_i32_1 = arith.constant 0 : i32
    return %c0_i32, %c0_i32_0 : i32, i32
  }
  func.func @transform_5(%arg0: i32) -> (i32, i32) {
    %c0_i32 = arith.constant 0 : i32
    %c0_i32_0 = arith.constant 0 : i32
    %c0_i32_1 = arith.constant 0 : i32
    return %c0_i32, %c0_i32_0 : i32, i32
  }
  func.func @transform_6(%arg0: i32) -> (i32, i32) {
    %c0_i32 = arith.constant 0 : i32
    %c0_i32_0 = arith.constant 0 : i32
    %c0_i32_1 = arith.constant 0 : i32
    return %c0_i32, %c0_i32_0 : i32, i32
  }
  func.func @transform_7(%arg0: i32) -> (i32, i32) {
    %c0_i32 = arith.constant 0 : i32
    %c0_i32_0 = arith.constant 0 : i32
    %c0_i32_1 = arith.constant 0 : i32
    return %c0_i32, %c0_i32_0 : i32, i32
  }
  func.func @transform_8(%arg0: i32) -> (i32, i32) {
    %c0_i32 = arith.constant 0 : i32
    %c0_i32_0 = arith.constant 0 : i32
    %c0_i32_1 = arith.constant 0 : i32
    return %c0_i32, %c0_i32_0 : i32, i32
  }
  func.func @transform_9(%arg0: i32) -> (i32, i32) {
    %c0_i32 = arith.constant 0 : i32
    %c0_i32_0 = arith.constant 0 : i32
    %c0_i32_1 = arith.constant 0 : i32
    return %c0_i32, %c0_i32_0 : i32, i32
  }
  func.func @transform_10(%arg0: i32) -> i32 {
    %c0_i32 = arith.constant 0 : i32
    %c0_i32_0 = arith.constant 0 : i32
    return %c0_i32 : i32
  }
  func.func @transform_11(%arg0: i32) -> (i32, i32) {
    %c0_i32 = arith.constant 0 : i32
    %c0_i32_0 = arith.constant 0 : i32
    return %arg0, %c0_i32 : i32, i32
  }
}

</mosaic_0001>

<llo_original>
// kernel: tpu_custom_call.1
$region0: #{tpu_custom_call.1}
  #allocation0 [shape = 'u32[]', space=smem, size = 0x4, offset = 0x4, fixed_abs, tag = 'smem constant byte address 0x4 - core index']
  #allocation1 [shape = 'u32[144,128]{1,0:T(1,128)}', space=vmem, size = 0x12000, scoped, tag = 'internal scratch']
  #allocation2 [shape = 'f32[1]{0:T(128)S(6)}', space=smem, size = 0x200, scoped, tag = 'scoped memory for tpu_custom_call.1']
  %s0 = inlined_call_operand.vmem [shape: f32[16,8], index: 0, kind: input, shape index: {}]
  %s1 = inlined_call_operand.vmem [shape: f32[16,4], index: 1, kind: input, shape index: {}]
  %s2 = inlined_call_operand.hbm [shape: f32[8,32], index: 2, kind: input, shape index: {}]
  %s3 = inlined_call_operand.hbm [shape: f32[4,32], index: 3, kind: input, shape index: {}]
  %s4 = inlined_call_operand.vmem [shape: f32[1,32], index: 4, kind: input, shape index: {}]
  %s5 = inlined_call_operand.vmem [shape: f32[32,32], index: 5, kind: input, shape index: {}]
  %s6 = inlined_call_operand.vmem [shape: f32[1,32], index: 6, kind: input, shape index: {}]
  %s7 = inlined_call_operand.vmem [shape: f32[32,32], index: 7, kind: input, shape index: {}]
  %s8 = inlined_call_operand.vmem [shape: f32[1,32], index: 8, kind: input, shape index: {}]
  %s9 = inlined_call_operand.vmem [shape: f32[1,32], index: 9, kind: input, shape index: {}]
  %s10 = inlined_call_operand.<no memory space> [shape: f32[1], index: 10, kind: input, shape index: {}]
  %s11 = inlined_call_operand.hbm [shape: f32[2,1,8], index: 11, kind: output, shape index: {}]
  %s12 = sld [smem:[#allocation0]]
  $region85: #{tpu_custom_call.1} parent=0
    _
  %s14 = ssub.s32 1, %s12
  %s15 = scalar_select 0, %s14, %s12
  %16 = sst [smem:[#allocation2]] %s10
  $region1: #{tpu_custom_call.1} parent=0
    #allocation3 [shape = 'u8[4096]{0}', space=vmem, size = 0x1000, scoped, tag = 'input window, operand 2, single buffered']
    #allocation4 [shape = 's32[2]{0}', space=sflag, size = 0x8, scoped, tag = 'scoped memory for tpu_custom_call.1']
    #allocation5 [shape = 's32[2]{0}', space=sflag, size = 0x8, scoped, tag = 'scoped memory for tpu_custom_call.1']
    #allocation6 [shape = 'u8[2048]{0}', space=vmem, size = 0x800, scoped, tag = 'input window, operand 3, single buffered']
    #allocation7 [shape = 's32[1]{0}', space=sflag, size = 0x4, scoped, tag = 'scoped memory for tpu_custom_call.1']
    #allocation8 [shape = 'u8[1024]{0}', space=vmem, size = 0x400, scoped, tag = 'output window, operand 0']
    %17 = vsyncpa [#allocation4], 0
    %18 = vsyncpa [#allocation7], 0
    %19 = vsyncpa [#allocation5], 0
    %s20 = scalar_lea.sflag [#allocation5], 1
    %21 = vsyncpa %s20, 0
    loop: start=0, step=1, limit=4
    $region2: #{tpu_custom_call.1} parent=1 // loop_pre_header
      _
    $region3: #{tpu_custom_call.1} parent=1 // loop_header
      %s23 = sphi 0, %s27
      %p24 = scmp.ge.s32.totalorder %s23, 4
      %s33 = sphi 0, %s35
      %s36 = sphi 0, %s33
      %s37 = sphi 0, %s36
      %s53 = sphi 0, %s37
      %s59 = sphi 0, %s61
      %s62 = sphi 0, %s59
      %s63 = sphi 0, %s62
      %s79 = sphi 0, %s63
      %s83 = sphi 0, %s83
      %s85 = sphi 0, %s83
      %s86 = sphi 0, %s85
      %s100 = sphi 0, %s86
      %s104 = sphi 0, %s104
      %s106 = sphi 0, %s104
      %s107 = sphi 0, %s106
      %s121 = sphi 0, %s107
      %s125 = sphi 0, %s125
      %s127 = sphi 0, %s125
      %s128 = sphi 0, %s127
      %s142 = sphi 0, %s128
      %s146 = sphi 0, %s146
      %s148 = sphi 0, %s146
      %s149 = sphi 0, %s148
      %s163 = sphi 0, %s149
      %s167 = sphi 0, %s167
      %s169 = sphi 0, %s167
      %s170 = sphi 0, %s169
      %s184 = sphi 0, %s170
      %s188 = sphi 0, %s188
      %s190 = sphi 0, %s188
      %s191 = sphi 0, %s190
      %s205 = sphi 0, %s191
      %s209 = sphi 0, %s209
      %s211 = sphi 0, %s209
      %s212 = sphi 0, %s211
      %s226 = sphi 0, %s212
      %s230 = sphi 0, %s230
      %s232 = sphi 0, %s230
      %s233 = sphi 0, %s232
      %s247 = sphi 0, %s233
      %s251 = sphi 0, %s251
      %s253 = sphi 0, %s251
      %s254 = sphi 0, %s253
      %s268 = sphi 0, %s254
      %s274 = sphi 0, %s276
      %s277 = sphi 0, %s274
      %s278 = sphi 0, %s277
      %s294 = sphi 0, %s278
    $region4: #{tpu_custom_call.1} parent=1 // loop_header_branch
      %26 = sbr.rel (%p24) target = $region8
    $region5: #{tpu_custom_call.1} parent=1 // loop_body
      %s28 = ssub.s32 %s23, 1
      %s29 = ssub.s32 %s23, 2
      %s30 = sadd.s32 %s23, 1
      %s31 = ssub.s32 %s23, %s30
      %p32 = scmp.eq.s32.totalorder %s31, 0
      %s34 = sadd.s32 %s33, 1
      %s35 = scalar_select %p32, %s33, %s34
      %p38 = pneg %p32
      %p39 = scmp.eq.s32.totalorder %s23, 1
      %p40 = por %p38, %p39
      %p41 = scmp.ne.s32.totalorder %s33, %s36
      %p42 = scmp.eq.s32.totalorder %s23, 0
      %p43 = por %p41, %p42
      %p44 = scmp.ne.s32.totalorder %s33, %s36
      %p45 = scmp.eq.s32.totalorder %s28, 1
      %p46 = por %p44, %p45
      %p47 = scmp.ne.s32.totalorder %s36, %s37
      %p48 = scmp.eq.s32.totalorder %s28, 0
      %p49 = por %p47, %p48
      %p50 = scmp.ne.s32.totalorder %s36, %s37
      %p51 = scmp.eq.s32.totalorder %s29, 1
      %p52 = por %p50, %p51
      %p54 = scmp.ne.s32.totalorder %s37, %s53
      %p55 = scmp.eq.s32.totalorder %s29, 0
      %p56 = por %p54, %p55
      %s57 = ssub.s32 %s23, %s30
      %p58 = scmp.eq.s32.totalorder %s57, 0
      %s60 = sadd.s32 %s59, 1
      %s61 = scalar_select %p58, %s59, %s60
      %p64 = pneg %p58
      %p65 = scmp.eq.s32.totalorder %s23, 1
      %p66 = por %p64, %p65
      %p67 = scmp.ne.s32.totalorder %s59, %s62
      %p68 = scmp.eq.s32.totalorder %s23, 0
      %p69 = por %p67, %p68
      %p70 = scmp.ne.s32.totalorder %s59, %s62
      %p71 = scmp.eq.s32.totalorder %s28, 1
      %p72 = por %p70, %p71
      %p73 = scmp.ne.s32.totalorder %s62, %s63
      %p74 = scmp.eq.s32.totalorder %s28, 0
      %p75 = por %p73, %p74
      %p76 = scmp.ne.s32.totalorder %s62, %s63
      %p77 = scmp.eq.s32.totalorder %s29, 1
      %p78 = por %p76, %p77
      %p80 = scmp.ne.s32.totalorder %s63, %s79
      %p81 = scmp.eq.s32.totalorder %s29, 0
      %p82 = por %p80, %p81
      %s84 = sadd.s32 %s83, 1
      %p87 = scmp.eq.s32.totalorder %s23, 1
      %p88 = scmp.ne.s32.totalorder %s83, %s85
      %p89 = scmp.eq.s32.totalorder %s23, 0
      %p90 = por %p88, %p89
      %p91 = scmp.ne.s32.totalorder %s83, %s85
      %p92 = scmp.eq.s32.totalorder %s28, 1
      %p93 = por %p91, %p92
      %p94 = scmp.ne.s32.totalorder %s85, %s86
      %p95 = scmp.eq.s32.totalorder %s28, 0
      %p96 = por %p94, %p95
      %p97 = scmp.ne.s32.totalorder %s85, %s86
      %p98 = scmp.eq.s32.totalorder %s29, 1
      %p99 = por %p97, %p98
      %p101 = scmp.ne.s32.totalorder %s86, %s100
      %p102 = scmp.eq.s32.totalorder %s29, 0
      %p103 = por %p101, %p102
      %s105 = sadd.s32 %s104, 1
      %p108 = scmp.eq.s32.totalorder %s23, 1
      %p109 = scmp.ne.s32.totalorder %s104, %s106
      %p110 = scmp.eq.s32.totalorder %s23, 0
      %p111 = por %p109, %p110
      %p112 = scmp.ne.s32.totalorder %s104, %s106
      %p113 = scmp.eq.s32.totalorder %s28, 1
      %p114 = por %p112, %p113
      %p115 = scmp.ne.s32.totalorder %s106, %s107
      %p116 = scmp.eq.s32.totalorder %s28, 0
      %p117 = por %p115, %p116
      %p118 = scmp.ne.s32.totalorder %s106, %s107
      %p119 = scmp.eq.s32.totalorder %s29, 1
      %p120 = por %p118, %p119
      %p122 = scmp.ne.s32.totalorder %s107, %s121
      %p123 = scmp.eq.s32.totalorder %s29, 0
      %p124 = por %p122, %p123
      %s126 = sadd.s32 %s125, 1
      %p129 = scmp.eq.s32.totalorder %s23, 1
      %p130 = scmp.ne.s32.totalorder %s125, %s127
      %p131 = scmp.eq.s32.totalorder %s23, 0
      %p132 = por %p130, %p131
      %p133 = scmp.ne.s32.totalorder %s125, %s127
      %p134 = scmp.eq.s32.totalorder %s28, 1
      %p135 = por %p133, %p134
      %p136 = scmp.ne.s32.totalorder %s127, %s128
      %p137 = scmp.eq.s32.totalorder %s28, 0
      %p138 = por %p136, %p137
      %p139 = scmp.ne.s32.totalorder %s127, %s128
      %p140 = scmp.eq.s32.totalorder %s29, 1
      %p141 = por %p139, %p140
      %p143 = scmp.ne.s32.totalorder %s128, %s142
      %p144 = scmp.eq.s32.totalorder %s29, 0
      %p145 = por %p143, %p144
      %s147 = sadd.s32 %s146, 1
      %p150 = scmp.eq.s32.totalorder %s23, 1
      %p151 = scmp.ne.s32.totalorder %s146, %s148
      %p152 = scmp.eq.s32.totalorder %s23, 0
      %p153 = por %p151, %p152
      %p154 = scmp.ne.s32.totalorder %s146, %s148
      %p155 = scmp.eq.s32.totalorder %s28, 1
      %p156 = por %p154, %p155
      %p157 = scmp.ne.s32.totalorder %s148, %s149
      %p158 = scmp.eq.s32.totalorder %s28, 0
      %p159 = por %p157, %p158
      %p160 = scmp.ne.s32.totalorder %s148, %s149
      %p161 = scmp.eq.s32.totalorder %s29, 1
      %p162 = por %p160, %p161
      %p164 = scmp.ne.s32.totalorder %s149, %s163
      %p165 = scmp.eq.s32.totalorder %s29, 0
      %p166 = por %p164, %p165
      %s168 = sadd.s32 %s167, 1
      %p171 = scmp.eq.s32.totalorder %s23, 1
      %p172 = scmp.ne.s32.totalorder %s167, %s169
      %p173 = scmp.eq.s32.totalorder %s23, 0
      %p174 = por %p172, %p173
      %p175 = scmp.ne.s32.totalorder %s167, %s169
      %p176 = scmp.eq.s32.totalorder %s28, 1
      %p177 = por %p175, %p176
      %p178 = scmp.ne.s32.totalorder %s169, %s170
      %p179 = scmp.eq.s32.totalorder %s28, 0
      %p180 = por %p178, %p179
      %p181 = scmp.ne.s32.totalorder %s169, %s170
      %p182 = scmp.eq.s32.totalorder %s29, 1
      %p183 = por %p181, %p182
      %p185 = scmp.ne.s32.totalorder %s170, %s184
      %p186 = scmp.eq.s32.totalorder %s29, 0
      %p187 = por %p185, %p186
      %s189 = sadd.s32 %s188, 1
      %p192 = scmp.eq.s32.totalorder %s23, 1
      %p193 = scmp.ne.s32.totalorder %s188, %s190
      %p194 = scmp.eq.s32.totalorder %s23, 0
      %p195 = por %p193, %p194
      %p196 = scmp.ne.s32.totalorder %s188, %s190
      %p197 = scmp.eq.s32.totalorder %s28, 1
      %p198 = por %p196, %p197
      %p199 = scmp.ne.s32.totalorder %s190, %s191
      %p200 = scmp.eq.s32.totalorder %s28, 0
      %p201 = por %p199, %p200
      %p202 = scmp.ne.s32.totalorder %s190, %s191
      %p203 = scmp.eq.s32.totalorder %s29, 1
      %p204 = por %p202, %p203
      %p206 = scmp.ne.s32.totalorder %s191, %s205
      %p207 = scmp.eq.s32.totalorder %s29, 0
      %p208 = por %p206, %p207
      %s210 = sadd.s32 %s209, 1
      %p213 = scmp.eq.s32.totalorder %s23, 1
      %p214 = scmp.ne.s32.totalorder %s209, %s211
      %p215 = scmp.eq.s32.totalorder %s23, 0
      %p216 = por %p214, %p215
      %p217 = scmp.ne.s32.totalorder %s209, %s211
      %p218 = scmp.eq.s32.totalorder %s28, 1
      %p219 = por %p217, %p218
      %p220 = scmp.ne.s32.totalorder %s211, %s212
      %p221 = scmp.eq.s32.totalorder %s28, 0
      %p222 = por %p220, %p221
      %p223 = scmp.ne.s32.totalorder %s211, %s212
      %p224 = scmp.eq.s32.totalorder %s29, 1
      %p225 = por %p223, %p224
      %p227 = scmp.ne.s32.totalorder %s212, %s226
      %p228 = scmp.eq.s32.totalorder %s29, 0
      %p229 = por %p227, %p228
      %s231 = sadd.s32 %s230, 1
      %p234 = scmp.eq.s32.totalorder %s23, 1
      %p235 = scmp.ne.s32.totalorder %s230, %s232
      %p236 = scmp.eq.s32.totalorder %s23, 0
      %p237 = por %p235, %p236
      %p238 = scmp.ne.s32.totalorder %s230, %s232
      %p239 = scmp.eq.s32.totalorder %s28, 1
      %p240 = por %p238, %p239
      %p241 = scmp.ne.s32.totalorder %s232, %s233
      %p242 = scmp.eq.s32.totalorder %s28, 0
      %p243 = por %p241, %p242
      %p244 = scmp.ne.s32.totalorder %s232, %s233
      %p245 = scmp.eq.s32.totalorder %s29, 1
      %p246 = por %p244, %p245
      %p248 = scmp.ne.s32.totalorder %s233, %s247
      %p249 = scmp.eq.s32.totalorder %s29, 0
      %p250 = por %p248, %p249
      %s252 = sadd.s32 %s251, 1
      %p255 = scmp.eq.s32.totalorder %s23, 1
      %p256 = scmp.ne.s32.totalorder %s251, %s253
      %p257 = scmp.eq.s32.totalorder %s23, 0
      %p258 = por %p256, %p257
      %p259 = scmp.ne.s32.totalorder %s251, %s253
      %p260 = scmp.eq.s32.totalorder %s28, 1
      %p261 = por %p259, %p260
      %p262 = scmp.ne.s32.totalorder %s253, %s254
      %p263 = scmp.eq.s32.totalorder %s28, 0
      %p264 = por %p262, %p263
      %p265 = scmp.ne.s32.totalorder %s253, %s254
      %p266 = scmp.eq.s32.totalorder %s29, 1
      %p267 = por %p265, %p266
      %p269 = scmp.ne.s32.totalorder %s254, %s268
      %p270 = scmp.eq.s32.totalorder %s29, 0
      %p271 = por %p269, %p270
      %s272 = ssub.s32 %s23, %s30
      %p273 = scmp.eq.s32.totalorder %s272, 0
      %s275 = sadd.s32 %s274, 1
      %s276 = scalar_select %p273, %s274, %s275
      %p279 = pneg %p273
      %p280 = scmp.eq.s32.totalorder %s23, 1
      %p281 = por %p279, %p280
      %p282 = scmp.ne.s32.totalorder %s274, %s277
      %p283 = scmp.eq.s32.totalorder %s23, 0
      %p284 = por %p282, %p283
      %p285 = scmp.ne.s32.totalorder %s274, %s277
      %p286 = scmp.eq.s32.totalorder %s28, 1
      %p287 = por %p285, %p286
      %p288 = scmp.ne.s32.totalorder %s277, %s278
      %p289 = scmp.eq.s32.totalorder %s28, 0
      %p290 = por %p288, %p289
      %p291 = scmp.ne.s32.totalorder %s277, %s278
      %p292 = scmp.eq.s32.totalorder %s29, 1
      %p293 = por %p291, %p292
      %p295 = scmp.ne.s32.totalorder %s278, %s294
      %p296 = scmp.eq.s32.totalorder %s29, 0
      %p297 = por %p295, %p296
      %p298 = scmp.le.s32.totalorder 1, %s23
      %p299 = scmp.lt.s32.totalorder %s23, 3
      %p300 = pnand %p298, %p299
      %p301 = pneg %p300
      // Predicated region
      $region9: #{tpu_custom_call.1} parent=5 // pred_check
        _
      $region10: #{tpu_custom_call.1} parent=5 // pred_check_branch
        %303 = sbr.rel (%p300) target = $region12
      $region11: #{tpu_custom_call.1} parent=5 // pred_region
        %s304 = ssub.s32 %s23, 1
        // Predicated region
        $region13: #{tpu_custom_call.1} parent=11 // pred_check
          %p305 = pneg %p96
        $region14: #{tpu_custom_call.1} parent=11 // pred_check_branch
          %307 = sbr.rel (%p305) target = $region16
        $region15: #{tpu_custom_call.1} parent=11 // pred_region
          %s309 = ssub.s32 128, 128
          %310 = vsyncadd [#allocation4], %s309
          %s312 = sshll.u32 [#allocation3], 4
          %s313 = int_to_ptr.vmem [resolvable:$true] %s312
          %315 = dma.hbm_to_vmem [thread:$0]  %s2, 128, %s313, [#allocation4]
        $region16: #{tpu_custom_call.1} parent=11 // pred_fallthru
          _
        // Predicated region
        $region17: #{tpu_custom_call.1} parent=11 // pred_check
          %p316 = pneg %p117
        $region18: #{tpu_custom_call.1} parent=11 // pred_check_branch
          %318 = sbr.rel (%p316) target = $region20
        $region19: #{tpu_custom_call.1} parent=11 // pred_region
          %s320 = ssub.s32 64, 64
          %321 = vsyncadd [#allocation7], %s320
          %s323 = sshll.u32 [#allocation6], 4
          %s324 = int_to_ptr.vmem [resolvable:$true] %s323
          %326 = dma.hbm_to_vmem [thread:$0]  %s3, 64, %s324, [#allocation7]
        $region20: #{tpu_custom_call.1} parent=11 // pred_fallthru
          _
        // Predicated region
        $region21: #{tpu_custom_call.1} parent=11 // pred_check
          %p327 = pneg %p138
        $region22: #{tpu_custom_call.1} parent=11 // pred_check_branch
          %329 = sbr.rel (%p327) target = $region24
        $region23: #{tpu_custom_call.1} parent=11 // pred_region
          _
        $region24: #{tpu_custom_call.1} parent=11 // pred_fallthru
          _
        // Predicated region
        $region25: #{tpu_custom_call.1} parent=11 // pred_check
          %p330 = pneg %p159
        $region26: #{tpu_custom_call.1} parent=11 // pred_check_branch
          %332 = sbr.rel (%p330) target = $region28
        $region27: #{tpu_custom_call.1} parent=11 // pred_region
          _
        $region28: #{tpu_custom_call.1} parent=11 // pred_fallthru
          _
        // Predicated region
        $region29: #{tpu_custom_call.1} parent=11 // pred_check
          %p333 = pneg %p180
        $region30: #{tpu_custom_call.1} parent=11 // pred_check_branch
          %335 = sbr.rel (%p333) target = $region32
        $region31: #{tpu_custom_call.1} parent=11 // pred_region
          _
        $region32: #{tpu_custom_call.1} parent=11 // pred_fallthru
          _
        // Predicated region
        $region33: #{tpu_custom_call.1} parent=11 // pred_check
          %p336 = pneg %p201
        $region34: #{tpu_custom_call.1} parent=11 // pred_check_branch
          %338 = sbr.rel (%p336) target = $region36
        $region35: #{tpu_custom_call.1} parent=11 // pred_region
          _
        $region36: #{tpu_custom_call.1} parent=11 // pred_fallthru
          _
        // Predicated region
        $region37: #{tpu_custom_call.1} parent=11 // pred_check
          %p339 = pneg %p222
        $region38: #{tpu_custom_call.1} parent=11 // pred_check_branch
          %341 = sbr.rel (%p339) target = $region40
        $region39: #{tpu_custom_call.1} parent=11 // pred_region
          _
        $region40: #{tpu_custom_call.1} parent=11 // pred_fallthru
          _
        // Predicated region
        $region41: #{tpu_custom_call.1} parent=11 // pred_check
          %p342 = pneg %p243
        $region42: #{tpu_custom_call.1} parent=11 // pred_check_branch
          %344 = sbr.rel (%p342) target = $region44
        $region43: #{tpu_custom_call.1} parent=11 // pred_region
          _
        $region44: #{tpu_custom_call.1} parent=11 // pred_fallthru
          _
        // Predicated region
        $region45: #{tpu_custom_call.1} parent=11 // pred_check
          %p345 = pneg %p264
        $region46: #{tpu_custom_call.1} parent=11 // pred_check_branch
          %347 = sbr.rel (%p345) target = $region48
        $region47: #{tpu_custom_call.1} parent=11 // pred_region
          _
        $region48: #{tpu_custom_call.1} parent=11 // pred_fallthru
          _
      $region12: #{tpu_custom_call.1} parent=5 // pred_fallthru
        _
      %p348 = scmp.lt.s32.totalorder %s23, 2
      // Predicated region
      $region49: #{tpu_custom_call.1} parent=5 // pred_check
        %p349 = pneg %p348
      $region50: #{tpu_custom_call.1} parent=5 // pred_check_branch
        %351 = sbr.rel (%p349) target = $region52
      $region51: #{tpu_custom_call.1} parent=5 // pred_region
        // Predicated region
        $region53: #{tpu_custom_call.1} parent=51 // pred_check
          %p352 = pneg %p43
        $region54: #{tpu_custom_call.1} parent=51 // pred_check_branch
          %354 = sbr.rel (%p352) target = $region56
        $region55: #{tpu_custom_call.1} parent=51 // pred_region
          %p355 = scmp.lt.s32.totalorder %s23, 1
          %s356 = scalar_select %p355, %s23, 1
          %s357 = smul.addr %s356, 8
          %s358 = scalar_lea.vmem %s0, %s357
        $region56: #{tpu_custom_call.1} parent=51 // pred_fallthru
          _
        // Predicated region
        $region57: #{tpu_custom_call.1} parent=51 // pred_check
          %p359 = pneg %p69
        $region58: #{tpu_custom_call.1} parent=51 // pred_check_branch
          %361 = sbr.rel (%p359) target = $region60
        $region59: #{tpu_custom_call.1} parent=51 // pred_region
          %p362 = scmp.lt.s32.totalorder %s23, 1
          %s363 = scalar_select %p362, %s23, 1
          %s364 = smul.addr %s363, 8
          %s365 = scalar_lea.vmem %s1, %s364
        $region60: #{tpu_custom_call.1} parent=51 // pred_fallthru
          _
      $region52: #{tpu_custom_call.1} parent=5 // pred_fallthru
        _
      %p366 = scmp.le.s32.totalorder 1, %s23
      %p367 = scmp.lt.s32.totalorder %s23, 3
      %p368 = pnand %p366, %p367
      %p369 = pneg %p368
      // Predicated region
      $region61: #{tpu_custom_call.1} parent=5 // pred_check
        _
      $region62: #{tpu_custom_call.1} parent=5 // pred_check_branch
        %371 = sbr.rel (%p368) target = $region64
      $region63: #{tpu_custom_call.1} parent=5 // pred_region
        %s372 = ssub.s32 %s23, 1
        // Predicated region
        $region65: #{tpu_custom_call.1} parent=63 // pred_check
          %p373 = pneg %p96
        $region66: #{tpu_custom_call.1} parent=63 // pred_check_branch
          %375 = sbr.rel (%p373) target = $region68
        $region67: #{tpu_custom_call.1} parent=63 // pred_region
          %376 = dma.done [#allocation4], 128
        $region68: #{tpu_custom_call.1} parent=63 // pred_fallthru
          _
        // Predicated region
        $region69: #{tpu_custom_call.1} parent=63 // pred_check
          %p377 = pneg %p117
        $region70: #{tpu_custom_call.1} parent=63 // pred_check_branch
          %379 = sbr.rel (%p377) target = $region72
        $region71: #{tpu_custom_call.1} parent=63 // pred_region
          %380 = dma.done [#allocation7], 64
        $region72: #{tpu_custom_call.1} parent=63 // pred_fallthru
          _
        %p381 = scmp.lt.s32.totalorder %s28, 1
        %s382 = scalar_select %p381, %s28, 1
        %s383 = smul.addr %s382, 8
        %s384 = scalar_lea.vmem %s0, %s383
        %p385 = pneg %p49
        %p386 = pneg %p46
        %p387 = scmp.lt.s32.totalorder %s28, 1
        %s388 = scalar_select %p387, %s28, 1
        %s389 = smul.addr %s388, 8
        %s390 = scalar_lea.vmem %s1, %s389
        %p391 = pneg %p75
        %p392 = pneg %p72
        %p393 = pneg %p96
        %p394 = pneg %p93
        %p395 = pneg %p117
        %p396 = pneg %p114
        %p397 = pneg %p138
        %p398 = pneg %p135
        %p399 = pneg %p159
        %p400 = pneg %p156
        %p401 = pneg %p180
        %p402 = pneg %p177
        %p403 = pneg %p201
        %p404 = pneg %p198
        %p405 = pneg %p222
        %p406 = pneg %p219
        %p407 = pneg %p243
        %p408 = pneg %p240
        %p409 = pneg %p264
        %p410 = pneg %p261
        %p411 = pneg %p290
        %p412 = pneg %p287
        %s413 = sand.u32 %s277, 1
        %s414 = scalar_lea.sflag [#allocation5], %s413
        %s415 = sand.u32 %s277, 1
        %s416 = scalar_lea.vmem [#allocation8], %s415
        %p417 = scmp.lt.s32.totalorder %s28, 1
        %s418 = scalar_select %p417, %s28, 1
        %s419 = smul.addr %s418, 8
        %s420 = scalar_lea.vmem %s0, %s419
        %p421 = scmp.lt.s32.totalorder %s28, 1
        %s422 = scalar_select %p421, %s28, 1
        %s423 = smul.addr %s422, 8
        %s424 = scalar_lea.vmem %s1, %s423
        %v425 = vld [vmem:[%s420] sm:$0xff]
        %v426 = vld [vmem:[#allocation3] sm:$0xff]
        %v427 = vld [vmem:[%s424] sm:$0xff]
        %v428 = vld [vmem:[#allocation6] sm:$0xf]
        %vm429 = vcmask 31744
        %v431 = vsel %vm429, %v427, 0
        %vm433 = vcmask 1043456
        %v435 = vsel %vm433, %v428, 0
        %437 = vmatprep.subr.mxu0 0.0
        %438 = vmatpush1.msra.mxu0 %v435
        %439 = vmatprep.subr.mxu0 0.0
        %440 = vmatpush1.msra.mxu0 0.0
        %441 = vmatprep.subr.mxu0 0.0
        %442 = vmatpush1.msra.mxu0 0.0
        %443 = vmatprep.subr.mxu0 0.0
        %444 = vmatpush1.msra.mxu0 0.0
        %445 = vmatprep.subr.mxu0 0.0
        %446 = vmatpush1.msra.mxu0 0.0
        %447 = vmatprep.subr.mxu0 0.0
        %448 = vmatpush1.msra.mxu0 0.0
        %449 = vmatprep.subr.mxu0 0.0
        %450 = vmatpush1.msra.mxu0 0.0
        %451 = vmatprep.subr.mxu0 0.0
        %452 = vmatpush1.msra.mxu0 0.0
        %453 = vmatprep.subr.mxu0 0.0
        %454 = vmatpush1.msra.mxu0 0.0
        %455 = vmatprep.subr.mxu0 0.0
        %456 = vmatpush1.msra.mxu0 0.0
        %457 = vmatprep.subr.mxu0 0.0
        %458 = vmatpush1.msra.mxu0 0.0
        %459 = vmatprep.subr.mxu0 0.0
        %460 = vmatpush1.msra.mxu0 0.0
        %461 = vmatprep.subr.mxu0 0.0
        %462 = vmatpush1.msra.mxu0 0.0
        %463 = vmatprep.subr.mxu0 0.0
        %464 = vmatpush1.msra.mxu0 0.0
        %465 = vmatprep.subr.mxu0 0.0
        %466 = vmatpush1.msra.mxu0 0.0
        %467 = vmatprep.subr.mxu0 0.0
        %468 = vmatpush1.msra.mxu0 0.0
        %469 = vmatprep.subr.mxu0 0.0
        %470 = vmatpush1.msra.mxu0 0.0
        %471 = vmatprep.subr.mxu0 0.0
        %472 = vmatpush1.msra.mxu0 0.0
        %473 = vmatprep.subr.mxu0 0.0
        %474 = vmatpush1.msra.mxu0 0.0
        %475 = vmatprep.subr.mxu0 0.0
        %476 = vmatpush1.msra.mxu0 0.0
        %477 = vmatprep.subr.mxu0 0.0
        %478 = vmatpush1.msra.mxu0 0.0
        %479 = vmatprep.subr.mxu0 0.0
        %480 = vmatpush1.msra.mxu0 0.0
        %481 = vmatprep.subr.mxu0 0.0
        %482 = vmatpush1.msra.mxu0 0.0
        %483 = vmatprep.subr.mxu0 0.0
        %484 = vmatpush1.msra.mxu0 0.0
        %485 = vmatprep.subr.mxu0 0.0
        %486 = vmatpush1.msra.mxu0 0.0
        %487 = vmatprep.subr.mxu0 0.0
        %488 = vmatpush1.msra.mxu0 0.0
        %489 = vmatprep.subr.mxu0 0.0
        %490 = vmatpush1.msra.mxu0 0.0
        %491 = vmatprep.subr.mxu0 0.0
        %492 = vmatpush1.msra.mxu0 0.0
        %493 = vmatprep.subr.mxu0 0.0
        %494 = vmatpush1.msra.mxu0 0.0
        %495 = vmatprep.subr.mxu0 0.0
        %496 = vmatpush1.msra.mxu0 0.0
        %497 = vmatprep.subr.mxu0 0.0
        %498 = vmatpush1.msra.mxu0 0.0
        %499 = vmatprep.subr.mxu0 0.0
        %500 = vmatpush1.msra.mxu0 0.0
        %501 = vmatprep.mubr.f32.mxu0 0.0
        %502 = vmatmul.mubr.f32.gmra.mrb[0].mxu0 %v431
        %v503 = vpop.f32.mrb[0].mxu0
        %v504 = vadd.f32 0.0, %v503
        %v505 = vpop.f32.mrb[0].mxu0
        %506 = vdwg.mxu0
        %vm507 = vcmask 64512
        %v509 = vsel %vm507, %v425, 0
        %511 = vmatprep.subr.mxu0 0.0
        %512 = vmatpush1.msra.mxu0 %v426
        %513 = vmatprep.subr.mxu0 0.0
        %514 = vmatpush1.msra.mxu0 0.0
        %515 = vmatprep.subr.mxu0 0.0
        %516 = vmatpush1.msra.mxu0 0.0
        %517 = vmatprep.subr.mxu0 0.0
        %518 = vmatpush1.msra.mxu0 0.0
        %519 = vmatprep.subr.mxu0 0.0
        %520 = vmatpush1.msra.mxu0 0.0
        %521 = vmatprep.subr.mxu0 0.0
        %522 = vmatpush1.msra.mxu0 0.0
        %523 = vmatprep.subr.mxu0 0.0
        %524 = vmatpush1.msra.mxu0 0.0
        %525 = vmatprep.subr.mxu0 0.0
        %526 = vmatpush1.msra.mxu0 0.0
        %527 = vmatprep.subr.mxu0 0.0
        %528 = vmatpush1.msra.mxu0 0.0
        %529 = vmatprep.subr.mxu0 0.0
        %530 = vmatpush1.msra.mxu0 0.0
        %531 = vmatprep.subr.mxu0 0.0
        %532 = vmatpush1.msra.mxu0 0.0
        %533 = vmatprep.subr.mxu0 0.0
        %534 = vmatpush1.msra.mxu0 0.0
        %535 = vmatprep.subr.mxu0 0.0
        %536 = vmatpush1.msra.mxu0 0.0
        %537 = vmatprep.subr.mxu0 0.0
        %538 = vmatpush1.msra.mxu0 0.0
        %539 = vmatprep.subr.mxu0 0.0
        %540 = vmatpush1.msra.mxu0 0.0
        %541 = vmatprep.subr.mxu0 0.0
        %542 = vmatpush1.msra.mxu0 0.0
        %543 = vmatprep.subr.mxu0 0.0
        %544 = vmatpush1.msra.mxu0 0.0
        %545 = vmatprep.subr.mxu0 0.0
        %546 = vmatpush1.msra.mxu0 0.0
        %547 = vmatprep.subr.mxu0 0.0
        %548 = vmatpush1.msra.mxu0 0.0
        %549 = vmatprep.subr.mxu0 0.0
        %550 = vmatpush1.msra.mxu0 0.0
        %551 = vmatprep.subr.mxu0 0.0
        %552 = vmatpush1.msra.mxu0 0.0
        %553 = vmatprep.subr.mxu0 0.0
        %554 = vmatpush1.msra.mxu0 0.0
        %555 = vmatprep.subr.mxu0 0.0
        %556 = vmatpush1.msra.mxu0 0.0
        %557 = vmatprep.subr.mxu0 0.0
        %558 = vmatpush1.msra.mxu0 0.0
        %559 = vmatprep.subr.mxu0 0.0
        %560 = vmatpush1.msra.mxu0 0.0
        %561 = vmatprep.subr.mxu0 0.0
        %562 = vmatpush1.msra.mxu0 0.0
        %563 = vmatprep.subr.mxu0 0.0
        %564 = vmatpush1.msra.mxu0 0.0
        %565 = vmatprep.subr.mxu0 0.0
        %566 = vmatpush1.msra.mxu0 0.0
        %567 = vmatprep.subr.mxu0 0.0
        %568 = vmatpush1.msra.mxu0 0.0
        %569 = vmatprep.subr.mxu0 0.0
        %570 = vmatpush1.msra.mxu0 0.0
        %571 = vmatprep.subr.mxu0 0.0
        %572 = vmatpush1.msra.mxu0 0.0
        %573 = vmatprep.subr.mxu0 0.0
        %574 = vmatpush1.msra.mxu0 0.0
        %575 = vmatprep.mubr.f32.mxu0 0.0
        %576 = vmatmul.mubr.f32.gmra.mrb[0].mxu0 %v509
        %v577 = vpop.f32.mrb[0].mxu0
        %v578 = vadd.f32 %v504, %v577
        %v579 = vpop.f32.mrb[0].mxu0
        %580 = vdwg.mxu0
        %v581 = vld [vmem:[%s4] sm:$0x1]
        %v583 = vlaneseq
        %v584 = vshrl.u32 %v583, 7
        %v585 = vsub.s32 0, %v584
        %v586 = vrot.slane %v581, %v585
        %v588 = vadd.f32 %v578, %v586
        %v589 = vmax.f32 %v588, 0.0
        %v590 = vld [vmem:[%s5] sm:$0xff]
        %v591 = vld [vmem:[%s5 + $0x8] sm:$0xff]
        %v592 = vld [vmem:[%s5 + $0x10] sm:$0xff]
        %v593 = vld [vmem:[%s5 + $0x18] sm:$0xff]
        %v594 = vld [vmem:[%s6] sm:$0x1]
        %v596 = vlaneseq
        %v597 = vshrl.u32 %v596, 7
        %v598 = vsub.s32 0, %v597
        %v599 = vrot.slane %v594, %v598
        %vm601 = vcmask 261120
        %v603 = vsel %vm601, %v589, 0
        %605 = vmatprep.subr.mxu0 0.0
        %606 = vmatpush1.msra.mxu0 %v590
        %607 = vmatprep.subr.mxu0 0.0
        %608 = vmatpush1.msra.mxu0 %v591
        %609 = vmatprep.subr.mxu0 0.0
        %610 = vmatpush1.msra.mxu0 %v592
        %611 = vmatprep.subr.mxu0 0.0
        %612 = vmatpush1.msra.mxu0 %v593
        %613 = vmatprep.subr.mxu0 0.0
        %614 = vmatpush1.msra.mxu0 0.0
        %615 = vmatprep.subr.mxu0 0.0
        %616 = vmatpush1.msra.mxu0 0.0
        %617 = vmatprep.subr.mxu0 0.0
        %618 = vmatpush1.msra.mxu0 0.0
        %619 = vmatprep.subr.mxu0 0.0
        %620 = vmatpush1.msra.mxu0 0.0
        %621 = vmatprep.subr.mxu0 0.0
        %622 = vmatpush1.msra.mxu0 0.0
        %623 = vmatprep.subr.mxu0 0.0
        %624 = vmatpush1.msra.mxu0 0.0
        %625 = vmatprep.subr.mxu0 0.0
        %626 = vmatpush1.msra.mxu0 0.0
        %627 = vmatprep.subr.mxu0 0.0
        %628 = vmatpush1.msra.mxu0 0.0
        %629 = vmatprep.subr.mxu0 0.0
        %630 = vmatpush1.msra.mxu0 0.0
        %631 = vmatprep.subr.mxu0 0.0
        %632 = vmatpush1.msra.mxu0 0.0
        %633 = vmatprep.subr.mxu0 0.0
        %634 = vmatpush1.msra.mxu0 0.0
        %635 = vmatprep.subr.mxu0 0.0
        %636 = vmatpush1.msra.mxu0 0.0
        %637 = vmatprep.subr.mxu0 0.0
        %638 = vmatpush1.msra.mxu0 0.0
        %639 = vmatprep.subr.mxu0 0.0
        %640 = vmatpush1.msra.mxu0 0.0
        %641 = vmatprep.subr.mxu0 0.0
        %642 = vmatpush1.msra.mxu0 0.0
        %643 = vmatprep.subr.mxu0 0.0
        %644 = vmatpush1.msra.mxu0 0.0
        %645 = vmatprep.subr.mxu0 0.0
        %646 = vmatpush1.msra.mxu0 0.0
        %647 = vmatprep.subr.mxu0 0.0
        %648 = vmatpush1.msra.mxu0 0.0
        %649 = vmatprep.subr.mxu0 0.0
        %650 = vmatpush1.msra.mxu0 0.0
        %651 = vmatprep.subr.mxu0 0.0
        %652 = vmatpush1.msra.mxu0 0.0
        %653 = vmatprep.subr.mxu0 0.0
        %654 = vmatpush1.msra.mxu0 0.0
        %655 = vmatprep.subr.mxu0 0.0
        %656 = vmatpush1.msra.mxu0 0.0
        %657 = vmatprep.subr.mxu0 0.0
        %658 = vmatpush1.msra.mxu0 0.0
        %659 = vmatprep.subr.mxu0 0.0
        %660 = vmatpush1.msra.mxu0 0.0
        %661 = vmatprep.subr.mxu0 0.0
        %662 = vmatpush1.msra.mxu0 0.0
        %663 = vmatprep.subr.mxu0 0.0
        %664 = vmatpush1.msra.mxu0 0.0
        %665 = vmatprep.subr.mxu0 0.0
        %666 = vmatpush1.msra.mxu0 0.0
        %667 = vmatprep.subr.mxu0 0.0
        %668 = vmatpush1.msra.mxu0 0.0
        %669 = vmatprep.mubr.f32.mxu0 0.0
        %670 = vmatmul.mubr.f32.gmra.mrb[0].mxu0 %v603
        %v671 = vpop.f32.mrb[0].mxu0
        %v672 = vadd.f32 %v599, %v671
        %v673 = vpop.f32.mrb[0].mxu0
        %674 = vdwg.mxu0
        %v675 = vmax.f32 %v672, 0.0
        %v676 = vld [vmem:[%s7] sm:$0xff]
        %v677 = vld [vmem:[%s7 + $0x8] sm:$0xff]
        %v678 = vld [vmem:[%s7 + $0x10] sm:$0xff]
        %v679 = vld [vmem:[%s7 + $0x18] sm:$0xff]
        %v680 = vld [vmem:[%s8] sm:$0x1]
        %v682 = vlaneseq
        %v683 = vshrl.u32 %v682, 7
        %v684 = vsub.s32 0, %v683
        %v685 = vrot.slane %v680, %v684
        %v688 = vsel %vm601, %v675, 0
        %690 = vmatprep.subr.mxu0 0.0
        %691 = vmatpush1.msra.mxu0 %v676
        %692 = vmatprep.subr.mxu0 0.0
        %693 = vmatpush1.msra.mxu0 %v677
        %694 = vmatprep.subr.mxu0 0.0
        %695 = vmatpush1.msra.mxu0 %v678
        %696 = vmatprep.subr.mxu0 0.0
        %697 = vmatpush1.msra.mxu0 %v679
        %698 = vmatprep.subr.mxu0 0.0
        %699 = vmatpush1.msra.mxu0 0.0
        %700 = vmatprep.subr.mxu0 0.0
        %701 = vmatpush1.msra.mxu0 0.0
        %702 = vmatprep.subr.mxu0 0.0
        %703 = vmatpush1.msra.mxu0 0.0
        %704 = vmatprep.subr.mxu0 0.0
        %705 = vmatpush1.msra.mxu0 0.0
        %706 = vmatprep.subr.mxu0 0.0
        %707 = vmatpush1.msra.mxu0 0.0
        %708 = vmatprep.subr.mxu0 0.0
        %709 = vmatpush1.msra.mxu0 0.0
        %710 = vmatprep.subr.mxu0 0.0
        %711 = vmatpush1.msra.mxu0 0.0
        %712 = vmatprep.subr.mxu0 0.0
        %713 = vmatpush1.msra.mxu0 0.0
        %714 = vmatprep.subr.mxu0 0.0
        %715 = vmatpush1.msra.mxu0 0.0
        %716 = vmatprep.subr.mxu0 0.0
        %717 = vmatpush1.msra.mxu0 0.0
        %718 = vmatprep.subr.mxu0 0.0
        %719 = vmatpush1.msra.mxu0 0.0
        %720 = vmatprep.subr.mxu0 0.0
        %721 = vmatpush1.msra.mxu0 0.0
        %722 = vmatprep.subr.mxu0 0.0
        %723 = vmatpush1.msra.mxu0 0.0
        %724 = vmatprep.subr.mxu0 0.0
        %725 = vmatpush1.msra.mxu0 0.0
        %726 = vmatprep.subr.mxu0 0.0
        %727 = vmatpush1.msra.mxu0 0.0
        %728 = vmatprep.subr.mxu0 0.0
        %729 = vmatpush1.msra.mxu0 0.0
        %730 = vmatprep.subr.mxu0 0.0
        %731 = vmatpush1.msra.mxu0 0.0
        %732 = vmatprep.subr.mxu0 0.0
        %733 = vmatpush1.msra.mxu0 0.0
        %734 = vmatprep.subr.mxu0 0.0
        %735 = vmatpush1.msra.mxu0 0.0
        %736 = vmatprep.subr.mxu0 0.0
        %737 = vmatpush1.msra.mxu0 0.0
        %738 = vmatprep.subr.mxu0 0.0
        %739 = vmatpush1.msra.mxu0 0.0
        %740 = vmatprep.subr.mxu0 0.0
        %741 = vmatpush1.msra.mxu0 0.0
        %742 = vmatprep.subr.mxu0 0.0
        %743 = vmatpush1.msra.mxu0 0.0
        %744 = vmatprep.subr.mxu0 0.0
        %745 = vmatpush1.msra.mxu0 0.0
        %746 = vmatprep.subr.mxu0 0.0
        %747 = vmatpush1.msra.mxu0 0.0
        %748 = vmatprep.subr.mxu0 0.0
        %749 = vmatpush1.msra.mxu0 0.0
        %750 = vmatprep.subr.mxu0 0.0
        %751 = vmatpush1.msra.mxu0 0.0
        %752 = vmatprep.subr.mxu0 0.0
        %753 = vmatpush1.msra.mxu0 0.0
        %754 = vmatprep.mubr.f32.mxu0 0.0
        %755 = vmatmul.mubr.f32.gmra.mrb[0].mxu0 %v688
        %v756 = vpop.f32.mrb[0].mxu0
        %v757 = vadd.f32 %v685, %v756
        %v758 = vpop.f32.mrb[0].mxu0
        %759 = vdwg.mxu0
        %v760 = vmax.f32 %v757, 0.0
        %v761 = vld [vmem:[%s9] sm:$0x1]
        %v763 = vlaneseq
        %v764 = vshrl.u32 %v763, 7
        %v765 = vsub.s32 0, %v764
        %v766 = vrot.slane %v761, %v765
        %v768 = vmul.f32 %v760, %v766
        %v769 = vsel %vm601, %v768, 0.0
        %770 = vadd.xlane.f32.xlu0 %v769
        %v771 = vpop.xlane.xlu0 %770
        %s772 = sld [smem:[#allocation2]]
        %v773 = vstv %s772
        %v774 = vadd.f32 %v771, %v773
        %v776 = vlaneseq
        %v777 = vand.u32 %v776, 127
        %v778 = vlaneseq
        %v779 = vshrl.u32 %v778, 7
        %v780 = vsub.s32 %v777, %v779
        %v781 = vrot.slane %v774, %v780
        %vm783 = vcmask 57344
        %784 = vst.msk [vmem:[%s416] sm:$0x1] %vm783, %v781
        %s785 = sand.u32 %s277, 1
        %s786 = scalar_lea.sflag [#allocation5], %s785
        %s787 = sand.u32 %s277, 1
        %s788 = scalar_lea.vmem [#allocation8], %s787
        // Predicated region
        $region73: #{tpu_custom_call.1} parent=63 // pred_check
          %p789 = pneg %p287
        $region74: #{tpu_custom_call.1} parent=63 // pred_check_branch
          %791 = sbr.rel (%p789) target = $region76
        $region75: #{tpu_custom_call.1} parent=63 // pred_region
          %s793 = ssub.s32 16, 16
          %794 = vsyncadd %s786, %s793
          %s795 = smul.addr %s28, 16
          %s796 = scalar_lea.hbm %s11, %s795
          %s798 = sshll.u32 %s788, 4
          %s799 = int_to_ptr.vmem [resolvable:$true] %s798
          %801 = dma.vmem_to_hbm [thread:$0]  %s799, 16, %s796, %s786
        $region76: #{tpu_custom_call.1} parent=63 // pred_fallthru
          _
      $region64: #{tpu_custom_call.1} parent=5 // pred_fallthru
        _
      %p802 = scmp.le.s32.totalorder 2, %s23
      // Predicated region
      $region77: #{tpu_custom_call.1} parent=5 // pred_check
        %p803 = pneg %p802
      $region78: #{tpu_custom_call.1} parent=5 // pred_check_branch
        %805 = sbr.rel (%p803) target = $region80
      $region79: #{tpu_custom_call.1} parent=5 // pred_region
        %s806 = ssub.s32 %s23, 2
        // Predicated region
        $region81: #{tpu_custom_call.1} parent=79 // pred_check
          %p807 = pneg %p293
        $region82: #{tpu_custom_call.1} parent=79 // pred_check_branch
          %809 = sbr.rel (%p807) target = $region84
        $region83: #{tpu_custom_call.1} parent=79 // pred_region
          %s810 = sand.u32 %s278, 1
          %s811 = scalar_lea.sflag [#allocation5], %s810
          %s812 = sand.u32 %s278, 1
          %s813 = scalar_lea.vmem [#allocation8], %s812
          %814 = dma.done %s811, 16
        $region84: #{tpu_custom_call.1} parent=79 // pred_fallthru
          _
      $region80: #{tpu_custom_call.1} parent=5 // pred_fallthru
        _
    $region6: #{tpu_custom_call.1} parent=1 // loop_footer
      %s27 = sadd.s32 1, %s23
    $region7: #{tpu_custom_call.1} parent=1 // loop_footer_branch
      %22 = sbr.rel target = $region3
    $region8: #{tpu_custom_call.1} parent=1 // loop_exit
      _
    %815 = vsyncpa [#allocation4], 1
    %s816 = scalar_lea.sflag [#allocation4], 1
    %817 = vsyncpa %s816, 1
    %818 = vsyncpa [#allocation7], 1
    %819 = vsyncpa [#allocation5], 1
    %s820 = scalar_lea.sflag [#allocation5], 1
    %821 = vsyncpa %s820, 1

// kernel: tpu_custom_call.1
$region0: #{tpu_custom_call.1}
  #allocation0 [shape = 'u32[]', space=smem, size = 0x4, offset = 0x4, fixed_abs, tag = 'smem constant byte address 0x4 - core index']
  #allocation1 [shape = 'u32[144,128]{1,0:T(1,128)}', space=vmem, size = 0x12000, scoped, tag = 'internal scratch']
  #allocation2 [shape = 'f32[1]{0:T(128)S(6)}', space=smem, size = 0x200, scoped, tag = 'scoped memory for tpu_custom_call.1']
  %s0 = inlined_call_operand.vmem [shape: f32[16,8], index: 0, kind: input, shape index: {}]
  %s1 = inlined_call_operand.vmem [shape: f32[16,4], index: 1, kind: input, shape index: {}]
  %s2 = inlined_call_operand.hbm [shape: f32[8,32], index: 2, kind: input, shape index: {}]
  %s3 = inlined_call_operand.hbm [shape: f32[4,32], index: 3, kind: input, shape index: {}]
  %s4 = inlined_call_operand.vmem [shape: f32[1,32], index: 4, kind: input, shape index: {}]
  %s5 = inlined_call_operand.vmem [shape: f32[32,32], index: 5, kind: input, shape index: {}]
  %s6 = inlined_call_operand.vmem [shape: f32[1,32], index: 6, kind: input, shape index: {}]
  %s7 = inlined_call_operand.vmem [shape: f32[32,32], index: 7, kind: input, shape index: {}]
  %s8 = inlined_call_operand.vmem [shape: f32[1,32], index: 8, kind: input, shape index: {}]
  %s9 = inlined_call_operand.vmem [shape: f32[1,32], index: 9, kind: input, shape index: {}]
  %s10 = inlined_call_operand.<no memory space> [shape: f32[1], index: 10, kind: input, shape index: {}]
  %s11 = inlined_call_operand.vmem [shape: f32[16,1], index: 11, kind: output, shape index: {}]
  %s12 = sld [smem:[#allocation0]]
  $region85: #{tpu_custom_call.1} parent=0
    _
  %s14 = ssub.s32 1, %s12
  %s15 = scalar_select 0, %s14, %s12
  %16 = sst [smem:[#allocation2]] %s10
  $region1: #{tpu_custom_call.1} parent=0
    #allocation3 [shape = 'u8[4096]{0}', space=vmem, size = 0x1000, scoped, tag = 'input window, operand 2, single buffered']
    #allocation4 [shape = 's32[2]{0}', space=sflag, size = 0x8, scoped, tag = 'scoped memory for tpu_custom_call.1']
    #allocation5 [shape = 'u8[2048]{0}', space=vmem, size = 0x800, scoped, tag = 'input window, operand 3, single buffered']
    #allocation6 [shape = 's32[1]{0}', space=sflag, size = 0x4, scoped, tag = 'scoped memory for tpu_custom_call.1']
    %17 = vsyncpa [#allocation4], 0
    %18 = vsyncpa [#allocation6], 0
    loop: start=0, step=1, limit=4
    $region2: #{tpu_custom_call.1} parent=1 // loop_pre_header
      _
    $region3: #{tpu_custom_call.1} parent=1 // loop_header
      %s20 = sphi 0, %s24
      %p21 = scmp.ge.s32.totalorder %s20, 4
      %s30 = sphi 0, %s32
      %s33 = sphi 0, %s30
      %s34 = sphi 0, %s33
      %s50 = sphi 0, %s34
      %s56 = sphi 0, %s58
      %s59 = sphi 0, %s56
      %s60 = sphi 0, %s59
      %s76 = sphi 0, %s60
      %s80 = sphi 0, %s80
      %s82 = sphi 0, %s80
      %s83 = sphi 0, %s82
      %s97 = sphi 0, %s83
      %s101 = sphi 0, %s101
      %s103 = sphi 0, %s101
      %s104 = sphi 0, %s103
      %s118 = sphi 0, %s104
      %s122 = sphi 0, %s122
      %s124 = sphi 0, %s122
      %s125 = sphi 0, %s124
      %s139 = sphi 0, %s125
      %s143 = sphi 0, %s143
      %s145 = sphi 0, %s143
      %s146 = sphi 0, %s145
      %s160 = sphi 0, %s146
      %s164 = sphi 0, %s164
      %s166 = sphi 0, %s164
      %s167 = sphi 0, %s166
      %s181 = sphi 0, %s167
      %s185 = sphi 0, %s185
      %s187 = sphi 0, %s185
      %s188 = sphi 0, %s187
      %s202 = sphi 0, %s188
      %s206 = sphi 0, %s206
      %s208 = sphi 0, %s206
      %s209 = sphi 0, %s208
      %s223 = sphi 0, %s209
      %s227 = sphi 0, %s227
      %s229 = sphi 0, %s227
      %s230 = sphi 0, %s229
      %s244 = sphi 0, %s230
      %s248 = sphi 0, %s248
      %s250 = sphi 0, %s248
      %s251 = sphi 0, %s250
      %s265 = sphi 0, %s251
      %s271 = sphi 0, %s273
      %s274 = sphi 0, %s271
      %s275 = sphi 0, %s274
      %s291 = sphi 0, %s275
    $region4: #{tpu_custom_call.1} parent=1 // loop_header_branch
      %23 = sbr.rel (%p21) target = $region8
    $region5: #{tpu_custom_call.1} parent=1 // loop_body
      %s25 = ssub.s32 %s20, 1
      %s26 = ssub.s32 %s20, 2
      %s27 = sadd.s32 %s20, 1
      %s28 = ssub.s32 %s20, %s27
      %p29 = scmp.eq.s32.totalorder %s28, 0
      %s31 = sadd.s32 %s30, 1
      %s32 = scalar_select %p29, %s30, %s31
      %p35 = pneg %p29
      %p36 = scmp.eq.s32.totalorder %s20, 1
      %p37 = por %p35, %p36
      %p38 = scmp.ne.s32.totalorder %s30, %s33
      %p39 = scmp.eq.s32.totalorder %s20, 0
      %p40 = por %p38, %p39
      %p41 = scmp.ne.s32.totalorder %s30, %s33
      %p42 = scmp.eq.s32.totalorder %s25, 1
      %p43 = por %p41, %p42
      %p44 = scmp.ne.s32.totalorder %s33, %s34
      %p45 = scmp.eq.s32.totalorder %s25, 0
      %p46 = por %p44, %p45
      %p47 = scmp.ne.s32.totalorder %s33, %s34
      %p48 = scmp.eq.s32.totalorder %s26, 1
      %p49 = por %p47, %p48
      %p51 = scmp.ne.s32.totalorder %s34, %s50
      %p52 = scmp.eq.s32.totalorder %s26, 0
      %p53 = por %p51, %p52
      %s54 = ssub.s32 %s20, %s27
      %p55 = scmp.eq.s32.totalorder %s54, 0
      %s57 = sadd.s32 %s56, 1
      %s58 = scalar_select %p55, %s56, %s57
      %p61 = pneg %p55
      %p62 = scmp.eq.s32.totalorder %s20, 1
      %p63 = por %p61, %p62
      %p64 = scmp.ne.s32.totalorder %s56, %s59
      %p65 = scmp.eq.s32.totalorder %s20, 0
      %p66 = por %p64, %p65
      %p67 = scmp.ne.s32.totalorder %s56, %s59
      %p68 = scmp.eq.s32.totalorder %s25, 1
      %p69 = por %p67, %p68
      %p70 = scmp.ne.s32.totalorder %s59, %s60
      %p71 = scmp.eq.s32.totalorder %s25, 0
      %p72 = por %p70, %p71
      %p73 = scmp.ne.s32.totalorder %s59, %s60
      %p74 = scmp.eq.s32.totalorder %s26, 1
      %p75 = por %p73, %p74
      %p77 = scmp.ne.s32.totalorder %s60, %s76
      %p78 = scmp.eq.s32.totalorder %s26, 0
      %p79 = por %p77, %p78
      %s81 = sadd.s32 %s80, 1
      %p84 = scmp.eq.s32.totalorder %s20, 1
      %p85 = scmp.ne.s32.totalorder %s80, %s82
      %p86 = scmp.eq.s32.totalorder %s20, 0
      %p87 = por %p85, %p86
      %p88 = scmp.ne.s32.totalorder %s80, %s82
      %p89 = scmp.eq.s32.totalorder %s25, 1
      %p90 = por %p88, %p89
      %p91 = scmp.ne.s32.totalorder %s82, %s83
      %p92 = scmp.eq.s32.totalorder %s25, 0
      %p93 = por %p91, %p92
      %p94 = scmp.ne.s32.totalorder %s82, %s83
      %p95 = scmp.eq.s32.totalorder %s26, 1
      %p96 = por %p94, %p95
      %p98 = scmp.ne.s32.totalorder %s83, %s97
      %p99 = scmp.eq.s32.totalorder %s26, 0
      %p100 = por %p98, %p99
      %s102 = sadd.s32 %s101, 1
      %p105 = scmp.eq.s32.totalorder %s20, 1
      %p106 = scmp.ne.s32.totalorder %s101, %s103
      %p107 = scmp.eq.s32.totalorder %s20, 0
      %p108 = por %p106, %p107
      %p109 = scmp.ne.s32.totalorder %s101, %s103
      %p110 = scmp.eq.s32.totalorder %s25, 1
      %p111 = por %p109, %p110
      %p112 = scmp.ne.s32.totalorder %s103, %s104
      %p113 = scmp.eq.s32.totalorder %s25, 0
      %p114 = por %p112, %p113
      %p115 = scmp.ne.s32.totalorder %s103, %s104
      %p116 = scmp.eq.s32.totalorder %s26, 1
      %p117 = por %p115, %p116
      %p119 = scmp.ne.s32.totalorder %s104, %s118
      %p120 = scmp.eq.s32.totalorder %s26, 0
      %p121 = por %p119, %p120
      %s123 = sadd.s32 %s122, 1
      %p126 = scmp.eq.s32.totalorder %s20, 1
      %p127 = scmp.ne.s32.totalorder %s122, %s124
      %p128 = scmp.eq.s32.totalorder %s20, 0
      %p129 = por %p127, %p128
      %p130 = scmp.ne.s32.totalorder %s122, %s124
      %p131 = scmp.eq.s32.totalorder %s25, 1
      %p132 = por %p130, %p131
      %p133 = scmp.ne.s32.totalorder %s124, %s125
      %p134 = scmp.eq.s32.totalorder %s25, 0
      %p135 = por %p133, %p134
      %p136 = scmp.ne.s32.totalorder %s124, %s125
      %p137 = scmp.eq.s32.totalorder %s26, 1
      %p138 = por %p136, %p137
      %p140 = scmp.ne.s32.totalorder %s125, %s139
      %p141 = scmp.eq.s32.totalorder %s26, 0
      %p142 = por %p140, %p141
      %s144 = sadd.s32 %s143, 1
      %p147 = scmp.eq.s32.totalorder %s20, 1
      %p148 = scmp.ne.s32.totalorder %s143, %s145
      %p149 = scmp.eq.s32.totalorder %s20, 0
      %p150 = por %p148, %p149
      %p151 = scmp.ne.s32.totalorder %s143, %s145
      %p152 = scmp.eq.s32.totalorder %s25, 1
      %p153 = por %p151, %p152
      %p154 = scmp.ne.s32.totalorder %s145, %s146
      %p155 = scmp.eq.s32.totalorder %s25, 0
      %p156 = por %p154, %p155
      %p157 = scmp.ne.s32.totalorder %s145, %s146
      %p158 = scmp.eq.s32.totalorder %s26, 1
      %p159 = por %p157, %p158
      %p161 = scmp.ne.s32.totalorder %s146, %s160
      %p162 = scmp.eq.s32.totalorder %s26, 0
      %p163 = por %p161, %p162
      %s165 = sadd.s32 %s164, 1
      %p168 = scmp.eq.s32.totalorder %s20, 1
      %p169 = scmp.ne.s32.totalorder %s164, %s166
      %p170 = scmp.eq.s32.totalorder %s20, 0
      %p171 = por %p169, %p170
      %p172 = scmp.ne.s32.totalorder %s164, %s166
      %p173 = scmp.eq.s32.totalorder %s25, 1
      %p174 = por %p172, %p173
      %p175 = scmp.ne.s32.totalorder %s166, %s167
      %p176 = scmp.eq.s32.totalorder %s25, 0
      %p177 = por %p175, %p176
      %p178 = scmp.ne.s32.totalorder %s166, %s167
      %p179 = scmp.eq.s32.totalorder %s26, 1
      %p180 = por %p178, %p179
      %p182 = scmp.ne.s32.totalorder %s167, %s181
      %p183 = scmp.eq.s32.totalorder %s26, 0
      %p184 = por %p182, %p183
      %s186 = sadd.s32 %s185, 1
      %p189 = scmp.eq.s32.totalorder %s20, 1
      %p190 = scmp.ne.s32.totalorder %s185, %s187
      %p191 = scmp.eq.s32.totalorder %s20, 0
      %p192 = por %p190, %p191
      %p193 = scmp.ne.s32.totalorder %s185, %s187
      %p194 = scmp.eq.s32.totalorder %s25, 1
      %p195 = por %p193, %p194
      %p196 = scmp.ne.s32.totalorder %s187, %s188
      %p197 = scmp.eq.s32.totalorder %s25, 0
      %p198 = por %p196, %p197
      %p199 = scmp.ne.s32.totalorder %s187, %s188
      %p200 = scmp.eq.s32.totalorder %s26, 1
      %p201 = por %p199, %p200
      %p203 = scmp.ne.s32.totalorder %s188, %s202
      %p204 = scmp.eq.s32.totalorder %s26, 0
      %p205 = por %p203, %p204
      %s207 = sadd.s32 %s206, 1
      %p210 = scmp.eq.s32.totalorder %s20, 1
      %p211 = scmp.ne.s32.totalorder %s206, %s208
      %p212 = scmp.eq.s32.totalorder %s20, 0
      %p213 = por %p211, %p212
      %p214 = scmp.ne.s32.totalorder %s206, %s208
      %p215 = scmp.eq.s32.totalorder %s25, 1
      %p216 = por %p214, %p215
      %p217 = scmp.ne.s32.totalorder %s208, %s209
      %p218 = scmp.eq.s32.totalorder %s25, 0
      %p219 = por %p217, %p218
      %p220 = scmp.ne.s32.totalorder %s208, %s209
      %p221 = scmp.eq.s32.totalorder %s26, 1
      %p222 = por %p220, %p221
      %p224 = scmp.ne.s32.totalorder %s209, %s223
      %p225 = scmp.eq.s32.totalorder %s26, 0
      %p226 = por %p224, %p225
      %s228 = sadd.s32 %s227, 1
      %p231 = scmp.eq.s32.totalorder %s20, 1
      %p232 = scmp.ne.s32.totalorder %s227, %s229
      %p233 = scmp.eq.s32.totalorder %s20, 0
      %p234 = por %p232, %p233
      %p235 = scmp.ne.s32.totalorder %s227, %s229
      %p236 = scmp.eq.s32.totalorder %s25, 1
      %p237 = por %p235, %p236
      %p238 = scmp.ne.s32.totalorder %s229, %s230
      %p239 = scmp.eq.s32.totalorder %s25, 0
      %p240 = por %p238, %p239
      %p241 = scmp.ne.s32.totalorder %s229, %s230
      %p242 = scmp.eq.s32.totalorder %s26, 1
      %p243 = por %p241, %p242
      %p245 = scmp.ne.s32.totalorder %s230, %s244
      %p246 = scmp.eq.s32.totalorder %s26, 0
      %p247 = por %p245, %p246
      %s249 = sadd.s32 %s248, 1
      %p252 = scmp.eq.s32.totalorder %s20, 1
      %p253 = scmp.ne.s32.totalorder %s248, %s250
      %p254 = scmp.eq.s32.totalorder %s20, 0
      %p255 = por %p253, %p254
      %p256 = scmp.ne.s32.totalorder %s248, %s250
      %p257 = scmp.eq.s32.totalorder %s25, 1
      %p258 = por %p256, %p257
      %p259 = scmp.ne.s32.totalorder %s250, %s251
      %p260 = scmp.eq.s32.totalorder %s25, 0
      %p261 = por %p259, %p260
      %p262 = scmp.ne.s32.totalorder %s250, %s251
      %p263 = scmp.eq.s32.totalorder %s26, 1
      %p264 = por %p262, %p263
      %p266 = scmp.ne.s32.totalorder %s251, %s265
      %p267 = scmp.eq.s32.totalorder %s26, 0
      %p268 = por %p266, %p267
      %s269 = ssub.s32 %s20, %s27
      %p270 = scmp.eq.s32.totalorder %s269, 0
      %s272 = sadd.s32 %s271, 1
      %s273 = scalar_select %p270, %s271, %s272
      %p276 = pneg %p270
      %p277 = scmp.eq.s32.totalorder %s20, 1
      %p278 = por %p276, %p277
      %p279 = scmp.ne.s32.totalorder %s271, %s274
      %p280 = scmp.eq.s32.totalorder %s20, 0
      %p281 = por %p279, %p280
      %p282 = scmp.ne.s32.totalorder %s271, %s274
      %p283 = scmp.eq.s32.totalorder %s25, 1
      %p284 = por %p282, %p283
      %p285 = scmp.ne.s32.totalorder %s274, %s275
      %p286 = scmp.eq.s32.totalorder %s25, 0
      %p287 = por %p285, %p286
      %p288 = scmp.ne.s32.totalorder %s274, %s275
      %p289 = scmp.eq.s32.totalorder %s26, 1
      %p290 = por %p288, %p289
      %p292 = scmp.ne.s32.totalorder %s275, %s291
      %p293 = scmp.eq.s32.totalorder %s26, 0
      %p294 = por %p292, %p293
      %p295 = scmp.le.s32.totalorder 1, %s20
      %p296 = scmp.lt.s32.totalorder %s20, 3
      %p297 = pnand %p295, %p296
      %p298 = pneg %p297
      // Predicated region
      $region9: #{tpu_custom_call.1} parent=5 // pred_check
        _
      $region10: #{tpu_custom_call.1} parent=5 // pred_check_branch
        %300 = sbr.rel (%p297) target = $region12
      $region11: #{tpu_custom_call.1} parent=5 // pred_region
        %s301 = ssub.s32 %s20, 1
        // Predicated region
        $region13: #{tpu_custom_call.1} parent=11 // pred_check
          %p302 = pneg %p93
        $region14: #{tpu_custom_call.1} parent=11 // pred_check_branch
          %304 = sbr.rel (%p302) target = $region16
        $region15: #{tpu_custom_call.1} parent=11 // pred_region
          %s306 = ssub.s32 128, 128
          %307 = vsyncadd [#allocation4], %s306
          %s309 = sshll.u32 [#allocation3], 4
          %s310 = int_to_ptr.vmem [resolvable:$true] %s309
          %312 = dma.hbm_to_vmem [thread:$0]  %s2, 128, %s310, [#allocation4]
        $region16: #{tpu_custom_call.1} parent=11 // pred_fallthru
          _
        // Predicated region
        $region17: #{tpu_custom_call.1} parent=11 // pred_check
          %p313 = pneg %p114
        $region18: #{tpu_custom_call.1} parent=11 // pred_check_branch
          %315 = sbr.rel (%p313) target = $region20
        $region19: #{tpu_custom_call.1} parent=11 // pred_region
          %s317 = ssub.s32 64, 64
          %318 = vsyncadd [#allocation6], %s317
          %s320 = sshll.u32 [#allocation5], 4
          %s321 = int_to_ptr.vmem [resolvable:$true] %s320
          %323 = dma.hbm_to_vmem [thread:$0]  %s3, 64, %s321, [#allocation6]
        $region20: #{tpu_custom_call.1} parent=11 // pred_fallthru
          _
        // Predicated region
        $region21: #{tpu_custom_call.1} parent=11 // pred_check
          %p324 = pneg %p135
        $region22: #{tpu_custom_call.1} parent=11 // pred_check_branch
          %326 = sbr.rel (%p324) target = $region24
        $region23: #{tpu_custom_call.1} parent=11 // pred_region
          _
        $region24: #{tpu_custom_call.1} parent=11 // pred_fallthru
          _
        // Predicated region
        $region25: #{tpu_custom_call.1} parent=11 // pred_check
          %p327 = pneg %p156
        $region26: #{tpu_custom_call.1} parent=11 // pred_check_branch
          %329 = sbr.rel (%p327) target = $region28
        $region27: #{tpu_custom_call.1} parent=11 // pred_region
          _
        $region28: #{tpu_custom_call.1} parent=11 // pred_fallthru
          _
        // Predicated region
        $region29: #{tpu_custom_call.1} parent=11 // pred_check
          %p330 = pneg %p177
        $region30: #{tpu_custom_call.1} parent=11 // pred_check_branch
          %332 = sbr.rel (%p330) target = $region32
        $region31: #{tpu_custom_call.1} parent=11 // pred_region
          _
        $region32: #{tpu_custom_call.1} parent=11 // pred_fallthru
          _
        // Predicated region
        $region33: #{tpu_custom_call.1} parent=11 // pred_check
          %p333 = pneg %p198
        $region34: #{tpu_custom_call.1} parent=11 // pred_check_branch
          %335 = sbr.rel (%p333) target = $region36
        $region35: #{tpu_custom_call.1} parent=11 // pred_region
          _
        $region36: #{tpu_custom_call.1} parent=11 // pred_fallthru
          _
        // Predicated region
        $region37: #{tpu_custom_call.1} parent=11 // pred_check
          %p336 = pneg %p219
        $region38: #{tpu_custom_call.1} parent=11 // pred_check_branch
          %338 = sbr.rel (%p336) target = $region40
        $region39: #{tpu_custom_call.1} parent=11 // pred_region
          _
        $region40: #{tpu_custom_call.1} parent=11 // pred_fallthru
          _
        // Predicated region
        $region41: #{tpu_custom_call.1} parent=11 // pred_check
          %p339 = pneg %p240
        $region42: #{tpu_custom_call.1} parent=11 // pred_check_branch
          %341 = sbr.rel (%p339) target = $region44
        $region43: #{tpu_custom_call.1} parent=11 // pred_region
          _
        $region44: #{tpu_custom_call.1} parent=11 // pred_fallthru
          _
        // Predicated region
        $region45: #{tpu_custom_call.1} parent=11 // pred_check
          %p342 = pneg %p261
        $region46: #{tpu_custom_call.1} parent=11 // pred_check_branch
          %344 = sbr.rel (%p342) target = $region48
        $region47: #{tpu_custom_call.1} parent=11 // pred_region
          _
        $region48: #{tpu_custom_call.1} parent=11 // pred_fallthru
          _
      $region12: #{tpu_custom_call.1} parent=5 // pred_fallthru
        _
      %p345 = scmp.lt.s32.totalorder %s20, 2
      // Predicated region
      $region49: #{tpu_custom_call.1} parent=5 // pred_check
        %p346 = pneg %p345
      $region50: #{tpu_custom_call.1} parent=5 // pred_check_branch
        %348 = sbr.rel (%p346) target = $region52
      $region51: #{tpu_custom_call.1} parent=5 // pred_region
        // Predicated region
        $region53: #{tpu_custom_call.1} parent=51 // pred_check
          %p349 = pneg %p40
        $region54: #{tpu_custom_call.1} parent=51 // pred_check_branch
          %351 = sbr.rel (%p349) target = $region56
        $region55: #{tpu_custom_call.1} parent=51 // pred_region
          %p352 = scmp.lt.s32.totalorder %s20, 1
          %s353 = scalar_select %p352, %s20, 1
          %s354 = smul.addr %s353, 8
          %s355 = scalar_lea.vmem %s0, %s354
        $region56: #{tpu_custom_call.1} parent=51 // pred_fallthru
          _
        // Predicated region
        $region57: #{tpu_custom_call.1} parent=51 // pred_check
          %p356 = pneg %p66
        $region58: #{tpu_custom_call.1} parent=51 // pred_check_branch
          %358 = sbr.rel (%p356) target = $region60
        $region59: #{tpu_custom_call.1} parent=51 // pred_region
          %p359 = scmp.lt.s32.totalorder %s20, 1
          %s360 = scalar_select %p359, %s20, 1
          %s361 = smul.addr %s360, 8
          %s362 = scalar_lea.vmem %s1, %s361
        $region60: #{tpu_custom_call.1} parent=51 // pred_fallthru
          _
      $region52: #{tpu_custom_call.1} parent=5 // pred_fallthru
        _
      %p363 = scmp.le.s32.totalorder 1, %s20
      %p364 = scmp.lt.s32.totalorder %s20, 3
      %p365 = pnand %p363, %p364
      %p366 = pneg %p365
      // Predicated region
      $region61: #{tpu_custom_call.1} parent=5 // pred_check
        _
      $region62: #{tpu_custom_call.1} parent=5 // pred_check_branch
        %368 = sbr.rel (%p365) target = $region64
      $region63: #{tpu_custom_call.1} parent=5 // pred_region
        %s369 = ssub.s32 %s20, 1
        // Predicated region
        $region65: #{tpu_custom_call.1} parent=63 // pred_check
          %p370 = pneg %p93
        $region66: #{tpu_custom_call.1} parent=63 // pred_check_branch
          %372 = sbr.rel (%p370) target = $region68
        $region67: #{tpu_custom_call.1} parent=63 // pred_region
          %373 = dma.done [#allocation4], 128
        $region68: #{tpu_custom_call.1} parent=63 // pred_fallthru
          _
        // Predicated region
        $region69: #{tpu_custom_call.1} parent=63 // pred_check
          %p374 = pneg %p114
        $region70: #{tpu_custom_call.1} parent=63 // pred_check_branch
          %376 = sbr.rel (%p374) target = $region72
        $region71: #{tpu_custom_call.1} parent=63 // pred_region
          %377 = dma.done [#allocation6], 64
        $region72: #{tpu_custom_call.1} parent=63 // pred_fallthru
          _
        %p378 = scmp.lt.s32.totalorder %s25, 1
        %s379 = scalar_select %p378, %s25, 1
        %s380 = smul.addr %s379, 8
        %s381 = scalar_lea.vmem %s0, %s380
        %p382 = pneg %p46
        %p383 = pneg %p43
        %p384 = scmp.lt.s32.totalorder %s25, 1
        %s385 = scalar_select %p384, %s25, 1
        %s386 = smul.addr %s385, 8
        %s387 = scalar_lea.vmem %s1, %s386
        %p388 = pneg %p72
        %p389 = pneg %p69
        %p390 = pneg %p93
        %p391 = pneg %p90
        %p392 = pneg %p114
        %p393 = pneg %p111
        %p394 = pneg %p135
        %p395 = pneg %p132
        %p396 = pneg %p156
        %p397 = pneg %p153
        %p398 = pneg %p177
        %p399 = pneg %p174
        %p400 = pneg %p198
        %p401 = pneg %p195
        %p402 = pneg %p219
        %p403 = pneg %p216
        %p404 = pneg %p240
        %p405 = pneg %p237
        %p406 = pneg %p261
        %p407 = pneg %p258
        %p408 = pneg %p287
        %p409 = pneg %p284
        %p410 = scmp.lt.s32.totalorder %s25, 1
        %s411 = scalar_select %p410, %s25, 1
        %s412 = smul.addr %s411, 8
        %s413 = scalar_lea.vmem %s11, %s412
        %p414 = scmp.lt.s32.totalorder %s25, 1
        %s415 = scalar_select %p414, %s25, 1
        %s416 = smul.addr %s415, 8
        %s417 = scalar_lea.vmem %s0, %s416
        %p418 = scmp.lt.s32.totalorder %s25, 1
        %s419 = scalar_select %p418, %s25, 1
        %s420 = smul.addr %s419, 8
        %s421 = scalar_lea.vmem %s1, %s420
        %p422 = scmp.lt.s32.totalorder %s25, 1
        %s423 = scalar_select %p422, %s25, 1
        %s424 = smul.addr %s423, 8
        %s425 = scalar_lea.vmem %s11, %s424
        %v426 = vld [vmem:[%s417] sm:$0xff]
        %v427 = vld [vmem:[#allocation3] sm:$0xff]
        %v428 = vld [vmem:[%s421] sm:$0xff]
        %v429 = vld [vmem:[#allocation5] sm:$0xf]
        %vm430 = vcmask 31744
        %v432 = vsel %vm430, %v428, 0
        %vm434 = vcmask 1043456
        %v436 = vsel %vm434, %v429, 0
        %438 = vmatprep.subr.mxu0 0.0
        %439 = vmatpush1.msra.mxu0 %v436
        %440 = vmatprep.subr.mxu0 0.0
        %441 = vmatpush1.msra.mxu0 0.0
        %442 = vmatprep.subr.mxu0 0.0
        %443 = vmatpush1.msra.mxu0 0.0
        %444 = vmatprep.subr.mxu0 0.0
        %445 = vmatpush1.msra.mxu0 0.0
        %446 = vmatprep.subr.mxu0 0.0
        %447 = vmatpush1.msra.mxu0 0.0
        %448 = vmatprep.subr.mxu0 0.0
        %449 = vmatpush1.msra.mxu0 0.0
        %450 = vmatprep.subr.mxu0 0.0
        %451 = vmatpush1.msra.mxu0 0.0
        %452 = vmatprep.subr.mxu0 0.0
        %453 = vmatpush1.msra.mxu0 0.0
        %454 = vmatprep.subr.mxu0 0.0
        %455 = vmatpush1.msra.mxu0 0.0
        %456 = vmatprep.subr.mxu0 0.0
        %457 = vmatpush1.msra.mxu0 0.0
        %458 = vmatprep.subr.mxu0 0.0
        %459 = vmatpush1.msra.mxu0 0.0
        %460 = vmatprep.subr.mxu0 0.0
        %461 = vmatpush1.msra.mxu0 0.0
        %462 = vmatprep.subr.mxu0 0.0
        %463 = vmatpush1.msra.mxu0 0.0
        %464 = vmatprep.subr.mxu0 0.0
        %465 = vmatpush1.msra.mxu0 0.0
        %466 = vmatprep.subr.mxu0 0.0
        %467 = vmatpush1.msra.mxu0 0.0
        %468 = vmatprep.subr.mxu0 0.0
        %469 = vmatpush1.msra.mxu0 0.0
        %470 = vmatprep.subr.mxu0 0.0
        %471 = vmatpush1.msra.mxu0 0.0
        %472 = vmatprep.subr.mxu0 0.0
        %473 = vmatpush1.msra.mxu0 0.0
        %474 = vmatprep.subr.mxu0 0.0
        %475 = vmatpush1.msra.mxu0 0.0
        %476 = vmatprep.subr.mxu0 0.0
        %477 = vmatpush1.msra.mxu0 0.0
        %478 = vmatprep.subr.mxu0 0.0
        %479 = vmatpush1.msra.mxu0 0.0
        %480 = vmatprep.subr.mxu0 0.0
        %481 = vmatpush1.msra.mxu0 0.0
        %482 = vmatprep.subr.mxu0 0.0
        %483 = vmatpush1.msra.mxu0 0.0
        %484 = vmatprep.subr.mxu0 0.0
        %485 = vmatpush1.msra.mxu0 0.0
        %486 = vmatprep.subr.mxu0 0.0
        %487 = vmatpush1.msra.mxu0 0.0
        %488 = vmatprep.subr.mxu0 0.0
        %489 = vmatpush1.msra.mxu0 0.0
        %490 = vmatprep.subr.mxu0 0.0
        %491 = vmatpush1.msra.mxu0 0.0
        %492 = vmatprep.subr.mxu0 0.0
        %493 = vmatpush1.msra.mxu0 0.0
        %494 = vmatprep.subr.mxu0 0.0
        %495 = vmatpush1.msra.mxu0 0.0
        %496 = vmatprep.subr.mxu0 0.0
        %497 = vmatpush1.msra.mxu0 0.0
        %498 = vmatprep.subr.mxu0 0.0
        %499 = vmatpush1.msra.mxu0 0.0
        %500 = vmatprep.subr.mxu0 0.0
        %501 = vmatpush1.msra.mxu0 0.0
        %502 = vmatprep.mubr.f32.mxu0 0.0
        %503 = vmatmul.mubr.f32.gmra.mrb[0].mxu0 %v432
        %v504 = vpop.f32.mrb[0].mxu0
        %v505 = vadd.f32 0.0, %v504
        %v506 = vpop.f32.mrb[0].mxu0
        %507 = vdwg.mxu0
        %vm508 = vcmask 64512
        %v510 = vsel %vm508, %v426, 0
        %512 = vmatprep.subr.mxu0 0.0
        %513 = vmatpush1.msra.mxu0 %v427
        %514 = vmatprep.subr.mxu0 0.0
        %515 = vmatpush1.msra.mxu0 0.0
        %516 = vmatprep.subr.mxu0 0.0
        %517 = vmatpush1.msra.mxu0 0.0
        %518 = vmatprep.subr.mxu0 0.0
        %519 = vmatpush1.msra.mxu0 0.0
        %520 = vmatprep.subr.mxu0 0.0
        %521 = vmatpush1.msra.mxu0 0.0
        %522 = vmatprep.subr.mxu0 0.0
        %523 = vmatpush1.msra.mxu0 0.0
        %524 = vmatprep.subr.mxu0 0.0
        %525 = vmatpush1.msra.mxu0 0.0
        %526 = vmatprep.subr.mxu0 0.0
        %527 = vmatpush1.msra.mxu0 0.0
        %528 = vmatprep.subr.mxu0 0.0
        %529 = vmatpush1.msra.mxu0 0.0
        %530 = vmatprep.subr.mxu0 0.0
        %531 = vmatpush1.msra.mxu0 0.0
        %532 = vmatprep.subr.mxu0 0.0
        %533 = vmatpush1.msra.mxu0 0.0
        %534 = vmatprep.subr.mxu0 0.0
        %535 = vmatpush1.msra.mxu0 0.0
        %536 = vmatprep.subr.mxu0 0.0
        %537 = vmatpush1.msra.mxu0 0.0
        %538 = vmatprep.subr.mxu0 0.0
        %539 = vmatpush1.msra.mxu0 0.0
        %540 = vmatprep.subr.mxu0 0.0
        %541 = vmatpush1.msra.mxu0 0.0
        %542 = vmatprep.subr.mxu0 0.0
        %543 = vmatpush1.msra.mxu0 0.0
        %544 = vmatprep.subr.mxu0 0.0
        %545 = vmatpush1.msra.mxu0 0.0
        %546 = vmatprep.subr.mxu0 0.0
        %547 = vmatpush1.msra.mxu0 0.0
        %548 = vmatprep.subr.mxu0 0.0
        %549 = vmatpush1.msra.mxu0 0.0
        %550 = vmatprep.subr.mxu0 0.0
        %551 = vmatpush1.msra.mxu0 0.0
        %552 = vmatprep.subr.mxu0 0.0
        %553 = vmatpush1.msra.mxu0 0.0
        %554 = vmatprep.subr.mxu0 0.0
        %555 = vmatpush1.msra.mxu0 0.0
        %556 = vmatprep.subr.mxu0 0.0
        %557 = vmatpush1.msra.mxu0 0.0
        %558 = vmatprep.subr.mxu0 0.0
        %559 = vmatpush1.msra.mxu0 0.0
        %560 = vmatprep.subr.mxu0 0.0
        %561 = vmatpush1.msra.mxu0 0.0
        %562 = vmatprep.subr.mxu0 0.0
        %563 = vmatpush1.msra.mxu0 0.0
        %564 = vmatprep.subr.mxu0 0.0
        %565 = vmatpush1.msra.mxu0 0.0
        %566 = vmatprep.subr.mxu0 0.0
        %567 = vmatpush1.msra.mxu0 0.0
        %568 = vmatprep.subr.mxu0 0.0
        %569 = vmatpush1.msra.mxu0 0.0
        %570 = vmatprep.subr.mxu0 0.0
        %571 = vmatpush1.msra.mxu0 0.0
        %572 = vmatprep.subr.mxu0 0.0
        %573 = vmatpush1.msra.mxu0 0.0
        %574 = vmatprep.subr.mxu0 0.0
        %575 = vmatpush1.msra.mxu0 0.0
        %576 = vmatprep.mubr.f32.mxu0 0.0
        %577 = vmatmul.mubr.f32.gmra.mrb[0].mxu0 %v510
        %v578 = vpop.f32.mrb[0].mxu0
        %v579 = vadd.f32 %v505, %v578
        %v580 = vpop.f32.mrb[0].mxu0
        %581 = vdwg.mxu0
        %v582 = vld [vmem:[%s4] sm:$0x1]
        %v584 = vlaneseq
        %v585 = vshrl.u32 %v584, 7
        %v586 = vsub.s32 0, %v585
        %v587 = vrot.slane %v582, %v586
        %v589 = vadd.f32 %v579, %v587
        %v590 = vmax.f32 %v589, 0.0
        %v591 = vld [vmem:[%s5] sm:$0xff]
        %v592 = vld [vmem:[%s5 + $0x8] sm:$0xff]
        %v593 = vld [vmem:[%s5 + $0x10] sm:$0xff]
        %v594 = vld [vmem:[%s5 + $0x18] sm:$0xff]
        %v595 = vld [vmem:[%s6] sm:$0x1]
        %v597 = vlaneseq
        %v598 = vshrl.u32 %v597, 7
        %v599 = vsub.s32 0, %v598
        %v600 = vrot.slane %v595, %v599
        %vm602 = vcmask 261120
        %v604 = vsel %vm602, %v590, 0
        %606 = vmatprep.subr.mxu0 0.0
        %607 = vmatpush1.msra.mxu0 %v591
        %608 = vmatprep.subr.mxu0 0.0
        %609 = vmatpush1.msra.mxu0 %v592
        %610 = vmatprep.subr.mxu0 0.0
        %611 = vmatpush1.msra.mxu0 %v593
        %612 = vmatprep.subr.mxu0 0.0
        %613 = vmatpush1.msra.mxu0 %v594
        %614 = vmatprep.subr.mxu0 0.0
        %615 = vmatpush1.msra.mxu0 0.0
        %616 = vmatprep.subr.mxu0 0.0
        %617 = vmatpush1.msra.mxu0 0.0
        %618 = vmatprep.subr.mxu0 0.0
        %619 = vmatpush1.msra.mxu0 0.0
        %620 = vmatprep.subr.mxu0 0.0
        %621 = vmatpush1.msra.mxu0 0.0
        %622 = vmatprep.subr.mxu0 0.0
        %623 = vmatpush1.msra.mxu0 0.0
        %624 = vmatprep.subr.mxu0 0.0
        %625 = vmatpush1.msra.mxu0 0.0
        %626 = vmatprep.subr.mxu0 0.0
        %627 = vmatpush1.msra.mxu0 0.0
        %628 = vmatprep.subr.mxu0 0.0
        %629 = vmatpush1.msra.mxu0 0.0
        %630 = vmatprep.subr.mxu0 0.0
        %631 = vmatpush1.msra.mxu0 0.0
        %632 = vmatprep.subr.mxu0 0.0
        %633 = vmatpush1.msra.mxu0 0.0
        %634 = vmatprep.subr.mxu0 0.0
        %635 = vmatpush1.msra.mxu0 0.0
        %636 = vmatprep.subr.mxu0 0.0
        %637 = vmatpush1.msra.mxu0 0.0
        %638 = vmatprep.subr.mxu0 0.0
        %639 = vmatpush1.msra.mxu0 0.0
        %640 = vmatprep.subr.mxu0 0.0
        %641 = vmatpush1.msra.mxu0 0.0
        %642 = vmatprep.subr.mxu0 0.0
        %643 = vmatpush1.msra.mxu0 0.0
        %644 = vmatprep.subr.mxu0 0.0
        %645 = vmatpush1.msra.mxu0 0.0
        %646 = vmatprep.subr.mxu0 0.0
        %647 = vmatpush1.msra.mxu0 0.0
        %648 = vmatprep.subr.mxu0 0.0
        %649 = vmatpush1.msra.mxu0 0.0
        %650 = vmatprep.subr.mxu0 0.0
        %651 = vmatpush1.msra.mxu0 0.0
        %652 = vmatprep.subr.mxu0 0.0
        %653 = vmatpush1.msra.mxu0 0.0
        %654 = vmatprep.subr.mxu0 0.0
        %655 = vmatpush1.msra.mxu0 0.0
        %656 = vmatprep.subr.mxu0 0.0
        %657 = vmatpush1.msra.mxu0 0.0
        %658 = vmatprep.subr.mxu0 0.0
        %659 = vmatpush1.msra.mxu0 0.0
        %660 = vmatprep.subr.mxu0 0.0
        %661 = vmatpush1.msra.mxu0 0.0
        %662 = vmatprep.subr.mxu0 0.0
        %663 = vmatpush1.msra.mxu0 0.0
        %664 = vmatprep.subr.mxu0 0.0
        %665 = vmatpush1.msra.mxu0 0.0
        %666 = vmatprep.subr.mxu0 0.0
        %667 = vmatpush1.msra.mxu0 0.0
        %668 = vmatprep.subr.mxu0 0.0
        %669 = vmatpush1.msra.mxu0 0.0
        %670 = vmatprep.mubr.f32.mxu0 0.0
        %671 = vmatmul.mubr.f32.gmra.mrb[0].mxu0 %v604
        %v672 = vpop.f32.mrb[0].mxu0
        %v673 = vadd.f32 %v600, %v672
        %v674 = vpop.f32.mrb[0].mxu0
        %675 = vdwg.mxu0
        %v676 = vmax.f32 %v673, 0.0
        %v677 = vld [vmem:[%s7] sm:$0xff]
        %v678 = vld [vmem:[%s7 + $0x8] sm:$0xff]
        %v679 = vld [vmem:[%s7 + $0x10] sm:$0xff]
        %v680 = vld [vmem:[%s7 + $0x18] sm:$0xff]
        %v681 = vld [vmem:[%s8] sm:$0x1]
        %v683 = vlaneseq
        %v684 = vshrl.u32 %v683, 7
        %v685 = vsub.s32 0, %v684
        %v686 = vrot.slane %v681, %v685
        %v689 = vsel %vm602, %v676, 0
        %691 = vmatprep.subr.mxu0 0.0
        %692 = vmatpush1.msra.mxu0 %v677
        %693 = vmatprep.subr.mxu0 0.0
        %694 = vmatpush1.msra.mxu0 %v678
        %695 = vmatprep.subr.mxu0 0.0
        %696 = vmatpush1.msra.mxu0 %v679
        %697 = vmatprep.subr.mxu0 0.0
        %698 = vmatpush1.msra.mxu0 %v680
        %699 = vmatprep.subr.mxu0 0.0
        %700 = vmatpush1.msra.mxu0 0.0
        %701 = vmatprep.subr.mxu0 0.0
        %702 = vmatpush1.msra.mxu0 0.0
        %703 = vmatprep.subr.mxu0 0.0
        %704 = vmatpush1.msra.mxu0 0.0
        %705 = vmatprep.subr.mxu0 0.0
        %706 = vmatpush1.msra.mxu0 0.0
        %707 = vmatprep.subr.mxu0 0.0
        %708 = vmatpush1.msra.mxu0 0.0
        %709 = vmatprep.subr.mxu0 0.0
        %710 = vmatpush1.msra.mxu0 0.0
        %711 = vmatprep.subr.mxu0 0.0
        %712 = vmatpush1.msra.mxu0 0.0
        %713 = vmatprep.subr.mxu0 0.0
        %714 = vmatpush1.msra.mxu0 0.0
        %715 = vmatprep.subr.mxu0 0.0
        %716 = vmatpush1.msra.mxu0 0.0
        %717 = vmatprep.subr.mxu0 0.0
        %718 = vmatpush1.msra.mxu0 0.0
        %719 = vmatprep.subr.mxu0 0.0
        %720 = vmatpush1.msra.mxu0 0.0
        %721 = vmatprep.subr.mxu0 0.0
        %722 = vmatpush1.msra.mxu0 0.0
        %723 = vmatprep.subr.mxu0 0.0
        %724 = vmatpush1.msra.mxu0 0.0
        %725 = vmatprep.subr.mxu0 0.0
        %726 = vmatpush1.msra.mxu0 0.0
        %727 = vmatprep.subr.mxu0 0.0
        %728 = vmatpush1.msra.mxu0 0.0
        %729 = vmatprep.subr.mxu0 0.0
        %730 = vmatpush1.msra.mxu0 0.0
        %731 = vmatprep.subr.mxu0 0.0
        %732 = vmatpush1.msra.mxu0 0.0
        %733 = vmatprep.subr.mxu0 0.0
        %734 = vmatpush1.msra.mxu0 0.0
        %735 = vmatprep.subr.mxu0 0.0
        %736 = vmatpush1.msra.mxu0 0.0
        %737 = vmatprep.subr.mxu0 0.0
        %738 = vmatpush1.msra.mxu0 0.0
        %739 = vmatprep.subr.mxu0 0.0
        %740 = vmatpush1.msra.mxu0 0.0
        %741 = vmatprep.subr.mxu0 0.0
        %742 = vmatpush1.msra.mxu0 0.0
        %743 = vmatprep.subr.mxu0 0.0
        %744 = vmatpush1.msra.mxu0 0.0
        %745 = vmatprep.subr.mxu0 0.0
        %746 = vmatpush1.msra.mxu0 0.0
        %747 = vmatprep.subr.mxu0 0.0
        %748 = vmatpush1.msra.mxu0 0.0
        %749 = vmatprep.subr.mxu0 0.0
        %750 = vmatpush1.msra.mxu0 0.0
        %751 = vmatprep.subr.mxu0 0.0
        %752 = vmatpush1.msra.mxu0 0.0
        %753 = vmatprep.subr.mxu0 0.0
        %754 = vmatpush1.msra.mxu0 0.0
        %755 = vmatprep.mubr.f32.mxu0 0.0
        %756 = vmatmul.mubr.f32.gmra.mrb[0].mxu0 %v689
        %v757 = vpop.f32.mrb[0].mxu0
        %v758 = vadd.f32 %v686, %v757
        %v759 = vpop.f32.mrb[0].mxu0
        %760 = vdwg.mxu0
        %v761 = vmax.f32 %v758, 0.0
        %v762 = vld [vmem:[%s9] sm:$0x1]
        %v764 = vlaneseq
        %v765 = vshrl.u32 %v764, 7
        %v766 = vsub.s32 0, %v765
        %v767 = vrot.slane %v762, %v766
        %v769 = vmul.f32 %v761, %v767
        %v770 = vsel %vm602, %v769, 0.0
        %771 = vadd.xlane.f32.xlu0 %v770
        %v772 = vpop.xlane.xlu0 %771
        %s773 = sld [smem:[#allocation2]]
        %v774 = vstv %s773
        %v775 = vadd.f32 %v772, %v774
        %vm776 = vcmask 7168
        %777 = vst.msk [vmem:[%s425] sm:$0xff] %vm776, %v775
        %p778 = scmp.lt.s32.totalorder %s25, 1
        %s779 = scalar_select %p778, %s25, 1
        %s780 = smul.addr %s779, 8
        %s781 = scalar_lea.vmem %s11, %s780
        // Predicated region
        $region73: #{tpu_custom_call.1} parent=63 // pred_check
          %p782 = pneg %p284
        $region74: #{tpu_custom_call.1} parent=63 // pred_check_branch
          %784 = sbr.rel (%p782) target = $region76
        $region75: #{tpu_custom_call.1} parent=63 // pred_region
          _
        $region76: #{tpu_custom_call.1} parent=63 // pred_fallthru
          _
      $region64: #{tpu_custom_call.1} parent=5 // pred_fallthru
        _
      %p785 = scmp.le.s32.totalorder 2, %s20
      // Predicated region
      $region77: #{tpu_custom_call.1} parent=5 // pred_check
        %p786 = pneg %p785
      $region78: #{tpu_custom_call.1} parent=5 // pred_check_branch
        %788 = sbr.rel (%p786) target = $region80
      $region79: #{tpu_custom_call.1} parent=5 // pred_region
        %s789 = ssub.s32 %s20, 2
        // Predicated region
        $region81: #{tpu_custom_call.1} parent=79 // pred_check
          %p790 = pneg %p290
        $region82: #{tpu_custom_call.1} parent=79 // pred_check_branch
          %792 = sbr.rel (%p790) target = $region84
        $region83: #{tpu_custom_call.1} parent=79 // pred_region
          %p793 = scmp.lt.s32.totalorder %s26, 1
          %s794 = scalar_select %p793, %s26, 1
          %s795 = smul.addr %s794, 8
          %s796 = scalar_lea.vmem %s11, %s795
        $region84: #{tpu_custom_call.1} parent=79 // pred_fallthru
          _
      $region80: #{tpu_custom_call.1} parent=5 // pred_fallthru
        _
    $region6: #{tpu_custom_call.1} parent=1 // loop_footer
      %s24 = sadd.s32 1, %s20
    $region7: #{tpu_custom_call.1} parent=1 // loop_footer_branch
      %19 = sbr.rel target = $region3
    $region8: #{tpu_custom_call.1} parent=1 // loop_exit
      _
    %797 = vsyncpa [#allocation4], 1
    %s798 = scalar_lea.sflag [#allocation4], 1
    %799 = vsyncpa %s798, 1
    %800 = vsyncpa [#allocation6], 1

</llo_original>
